<compile_context>
chip_gen: v7x
topology: tpu7x:2x2x1
jax: 0.10.0
libtpu: 0.0.40
codegen_flags: <defaults>
</compile_context>

<pallas_src>
import functools
import math

import jax
import jax.numpy as jnp
from jax.experimental import pallas as pl
from jax.experimental.pallas import tpu as pltpu


def _asgu_kernel(smask_ref, xq_ref, xk_ref, res_ref, gate_ref,
                 wq_ref, bq_ref, wk_ref, bk_ref, gamma_ref, beta_ref,
                 *rest, num_heads, window, eps, tq, write_probs, matmul_dtype):
    # smask_ref: (1, 1, S)   per-key sequence mask (sep/first-token already zeroed)
    # xq_ref:    (1, TQ, H)  query-row tile of transformer token reps
    # xk_ref:    (1, S, H)   full-sequence key source (constant across query tiles)
    # res_ref:   (1, TQ, G)  first half of se token reps (pass-through)
    # gate_ref:  (1, S, G)   second half of se token reps (gate, full sequence)
    # wq/wk:     (nh, H, d)  per-head projection weights (scale folded into wq/bq)
    # bq/bk:     (nh, 1, d)
    # gamma/beta:(1, G)      LayerNorm affine params
    # out_ref:   (1, TQ, H)  concat([res, probs @ gate_norm], -1)
    # probs_ref: (1, TQ, S)  attention probabilities (only if write_probs)
    if write_probs:
        out_ref, probs_ref, k_scr, gate_scr = rest
    else:
        out_ref, k_scr, gate_scr = rest
        probs_ref = None

    S = xk_ref.shape[1]
    G = gate_ref.shape[2]
    qi = pl.program_id(1)

    # ---- per-batch preprocessing (runs once per batch element, cached in VMEM) ----
    @pl.when(qi == 0)
    def _():
        xk = xk_ref[0].astype(matmul_dtype)                               # (S, H)
        for h in range(num_heads):
            kh = jnp.dot(xk, wk_ref[h].astype(matmul_dtype),
                         preferred_element_type=jnp.float32) + bk_ref[h]  # (S, d)
            k_scr[h] = kh.astype(k_scr.dtype)
        # Two-pass LayerNorm (centered variance; avoids E[x^2]-E[x]^2 cancellation).
        g = gate_ref[0]                                                   # (S, G)
        mean = jnp.mean(g, axis=-1, keepdims=True)
        c = g - mean
        var = jnp.mean(c * c, axis=-1, keepdims=True)
        gate_scr[...] = (c * jax.lax.rsqrt(var + eps)) * gamma_ref[...] + beta_ref[...]

    # ---- per-head scores for this query tile, reduced with max over heads ----
    xq = xq_ref[0].astype(matmul_dtype)                                   # (TQ, H)
    smax = None
    for h in range(num_heads):
        qh = (jnp.dot(xq, wq_ref[h].astype(matmul_dtype),
                      preferred_element_type=jnp.float32)
              + bq_ref[h]).astype(matmul_dtype)                           # (TQ, d)
        sh = jax.lax.dot_general(qh, k_scr[h], (((1,), (1,)), ((), ())),
                                 preferred_element_type=jnp.float32)      # (TQ, S)
        smax = sh if smax is None else jnp.maximum(smax, sh)

    # ---- sliding-window band + key mask, generated in-kernel (no HBM band array) ----
    q0 = qi * tq
    row = q0 + jax.lax.broadcasted_iota(jnp.int32, (tq, S), 0)
    col = jax.lax.broadcasted_iota(jnp.int32, (tq, S), 1)
    allowed = jnp.logical_and(jnp.abs(row - col) <= window,
                              smask_ref[0] > 0.0)                         # (TQ, S)
    scores = jnp.where(allowed, smax, smax - 10000.0)

    # ---- softmax over keys (fully-masked rows become uniform, matching PyTorch) ----
    m = jnp.max(scores, axis=-1, keepdims=True)
    e = jnp.exp(scores - m)
    denom = jnp.sum(e, axis=-1, keepdims=True)
    inv = pl.reciprocal(denom, approx=True)        # EUP slot
    inv = inv * (2.0 - denom * inv)                # one Newton step -> ~f32 accuracy
    probs = e * inv                                # (TQ, S)

    # ---- gate mixing and direct (lane-dense) output stores, no concat temporary ----
    gate_out = jnp.dot(probs.astype(matmul_dtype),
                       gate_scr[...].astype(matmul_dtype),
                       preferred_element_type=jnp.float32)                # (TQ, G)
    out_ref[0, :, :G] = res_ref[0].astype(out_ref.dtype)
    out_ref[0, :, G:] = gate_out.astype(out_ref.dtype)
    if probs_ref is not None:
        probs_ref[0] = probs.astype(probs_ref.dtype)


def _pick_vmem_limit():
    cap = 128 * 1024 * 1024
    try:
        cap = int(pltpu.get_tpu_info().vmem_capacity_bytes)
    except Exception:
        pass
    # Leave ~25% headroom for compiler scratch / double-buffering; cap at 100 MiB.
    return int(min(cap - cap // 4, 100 * 1024 * 1024))


def _pick_tq(S, target=256):
    if S <= target:
        return S
    best = None
    for t in range(8, min(target, S) + 1, 8):
        if S % t == 0:
            best = t
    return best if best is not None else S


def _build_key_mask(tok_attention_mask, bs, seq):
    """Replicates SlidingWindowSelfAttenion._get_attn_mask seq-mask adjustment."""
    if tok_attention_mask is None:
        return jnp.ones((bs, seq), jnp.float32)
    m = tok_attention_mask.astype(jnp.float32)
    sep = jnp.sum((m > 0).astype(jnp.int32), axis=1) - 1   # count_nonzero - 1
    m = m.at[jnp.arange(bs), sep].set(0.0)
    m = m.at[:, 0].set(0.0)
    return m


def attn_spatial_gating_unit(x, se, wq, bq, wk, bk, gamma, beta, *,
                             tok_attention_mask=None, num_heads, window, eps=1e-5,
                             tq=None, output_attentions=True,
                             matmul_dtype=jnp.float32):
    """x, se: (bs, seq, hidden) f32 -> (out (bs,seq,hidden)[, probs (bs,seq,seq)])."""
    bs, S, H = x.shape
    A = wq.shape[1]
    G = H // 2
    d = H // num_heads
    assert H % num_heads == 0 and A == H
    assert G % 128 == 0, "hidden//2 must be a multiple of 128 for lane-dense split"
    if tq is None:
        tq = _pick_tq(S)
    assert S % tq == 0 and (tq % 8 == 0 or tq == S)

    # Fold 1/sqrt(d) into the query projection (max over heads commutes with a
    # positive scale) and reshape weights to per-head (nh, H, d) layout so each
    # head's q/k slab is lane-aligned without in-kernel lane slicing.
    scale = 1.0 / math.sqrt(d)
    wqh = (wq * scale).reshape(H, num_heads, d).transpose(1, 0, 2)   # (nh, H, d)
    wkh = wk.reshape(H, num_heads, d).transpose(1, 0, 2)             # (nh, H, d)
    bqh = (bq * scale).reshape(num_heads, 1, d)
    bkh = bk.reshape(num_heads, 1, d)
    gamma2 = gamma.reshape(1, G)
    beta2 = beta.reshape(1, G)

    smask = _build_key_mask(tok_attention_mask, bs, S).reshape(bs, 1, S)

    kernel = functools.partial(_asgu_kernel, num_heads=num_heads, window=window,
                               eps=eps, tq=tq, write_probs=output_attentions,
                               matmul_dtype=matmul_dtype)

    in_specs = [
        pl.BlockSpec((1, 1, S),          lambda b, q: (b, 0, 0)),   # key mask
        pl.BlockSpec((1, tq, H),         lambda b, q: (b, q, 0)),   # x (query rows)
        pl.BlockSpec((1, S, H),          lambda b, q: (b, 0, 0)),   # x (key source)
        pl.BlockSpec((1, tq, G),         lambda b, q: (b, q, 0)),   # se: res half
        pl.BlockSpec((1, S, G),          lambda b, q: (b, 0, 1)),   # se: gate half
        pl.BlockSpec((num_heads, H, d),  lambda b, q: (0, 0, 0)),   # Wq (scaled)
        pl.BlockSpec((num_heads, 1, d),  lambda b, q: (0, 0, 0)),   # bq (scaled)
        pl.BlockSpec((num_heads, H, d),  lambda b, q: (0, 0, 0)),   # Wk
        pl.BlockSpec((num_heads, 1, d),  lambda b, q: (0, 0, 0)),   # bk
        pl.BlockSpec((1, G),             lambda b, q: (0, 0)),      # gamma
        pl.BlockSpec((1, G),             lambda b, q: (0, 0)),      # beta
    ]
    out_specs = [pl.BlockSpec((1, tq, H), lambda b, q: (b, q, 0))]
    out_shapes = [jax.ShapeDtypeStruct((bs, S, H), jnp.float32)]
    if output_attentions:
        out_specs.append(pl.BlockSpec((1, tq, S), lambda b, q: (b, q, 0)))
        out_shapes.append(jax.ShapeDtypeStruct((bs, S, S), jnp.float32))

    outs = pl.pallas_call(
        kernel,
        out_shape=tuple(out_shapes),
        grid_spec=pltpu.PrefetchScalarGridSpec(
            num_scalar_prefetch=0,
            grid=(bs, S // tq),
            in_specs=in_specs,
            out_specs=out_specs,
            scratch_shapes=[
                pltpu.VMEM((num_heads, S, d), matmul_dtype),  # cached K (per batch)
                pltpu.VMEM((S, G), jnp.float32),              # cached LayerNorm(gate)
            ]),
        compiler_params=pltpu.CompilerParams(
            dimension_semantics=("parallel", "arbitrary"),
            vmem_limit_bytes=_pick_vmem_limit()),
    )(smask, x, x, se, se, wqh, bqh, wkh, bkh, gamma2, beta2)
    return outs


# ----------------------------- pure-JAX reference -----------------------------
def _build_band(seq, window):
    r = jnp.arange(seq)[:, None]
    c = jnp.arange(seq)[None, :]
    return (jnp.abs(r - c) <= window).astype(jnp.float32)


def _reference(x, se, wq, bq, wk, bk, gamma, beta, *,
               tok_attention_mask, num_heads, window, eps=1e-5):
    bs, S, H = x.shape
    G = H // 2
    d = H // num_heads
    res, gate = se[..., :G], se[..., G:]
    mean = jnp.mean(gate, -1, keepdims=True)
    var = jnp.mean((gate - mean) ** 2, -1, keepdims=True)
    gate = (gate - mean) * jax.lax.rsqrt(var + eps) * gamma + beta
    q = (x @ wq + bq).reshape(bs, S, num_heads, d).transpose(0, 2, 1, 3)
    k = (x @ wk + bk).reshape(bs, S, num_heads, d).transpose(0, 2, 1, 3)
    scores = jnp.einsum('bhqd,bhkd->bhqk', q, k) / math.sqrt(d)
    band = _build_band(S, window)
    smask = _build_key_mask(tok_attention_mask, bs, S)
    sm = smask[:, None, None, :] * band[None, None]
    scores = scores + (1.0 - sm) * (-10000.0)
    scores = jnp.max(scores, axis=1)                 # max over heads (use_value=False)
    probs = jax.nn.softmax(scores, axis=-1)
    gate_out = jnp.einsum('bqk,bkg->bqg', probs, gate)
    out = jnp.concatenate([res, gate_out], axis=-1)
    return out, probs


if __name__ == "__main__":
    hidden, num_heads, seq, bs, window = 256, 4, 16, 2, 3

    key = jax.random.PRNGKey(0)
    ks = jax.random.split(key, 8)
    x = jax.random.normal(ks[0], (bs, seq, hidden), jnp.float32)
    se = jax.random.normal(ks[1], (bs, seq, hidden), jnp.float32)
    wq = jax.random.normal(ks[2], (hidden, hidden), jnp.float32) * 0.05
    bq = jax.random.normal(ks[3], (hidden,), jnp.float32) * 0.02
    wk = jax.random.normal(ks[4], (hidden, hidden), jnp.float32) * 0.05
    bk = jax.random.normal(ks[5], (hidden,), jnp.float32) * 0.02
    gamma = 1.0 + 0.1 * jax.random.normal(ks[6], (hidden // 2,), jnp.float32)
    beta = 0.1 * jax.random.normal(ks[7], (hidden // 2,), jnp.float32)

    # batch 0: no padding; batch 1: last four tokens padded.
    mask = jnp.ones((bs, seq), jnp.float32).at[1, -4:].set(0.0)

    out, probs = attn_spatial_gating_unit(
        x, se, wq, bq, wk, bk, gamma, beta,
        tok_attention_mask=mask, num_heads=num_heads, window=window,
        tq=8, output_attentions=True)
    out = jax.block_until_ready(out)
    probs = jax.block_until_ready(probs)

    ref_out, ref_probs = _reference(
        x, se, wq, bq, wk, bk, gamma, beta,
        tok_attention_mask=mask, num_heads=num_heads, window=window)

    assert out.shape == (bs, seq, hidden)
    assert probs.shape == (bs, seq, seq)
    assert jnp.allclose(out, ref_out, atol=5e-4, rtol=5e-4), "out mismatch vs reference"
    assert jnp.allclose(probs, ref_probs, atol=5e-4, rtol=5e-4), "probs mismatch vs reference"

    print("KERNEL_OK")
</pallas_src>

<mosaic_0001>
module attributes {stable_mosaic.version = 11 : i64} {
  func.func @_asgu_kernel(%arg0: i32, %arg1: i32, %arg2: memref<1x1x16xf32, #tpu.memory_space<vmem>>, %arg3: memref<1x8x256xf32, #tpu.memory_space<vmem>>, %arg4: memref<1x16x256xf32, #tpu.memory_space<vmem>>, %arg5: memref<1x8x128xf32, #tpu.memory_space<vmem>>, %arg6: memref<1x16x128xf32, #tpu.memory_space<vmem>>, %arg7: memref<4x256x64xf32, #tpu.memory_space<vmem>>, %arg8: memref<4x1x64xf32, #tpu.memory_space<vmem>>, %arg9: memref<4x256x64xf32, #tpu.memory_space<vmem>>, %arg10: memref<4x1x64xf32, #tpu.memory_space<vmem>>, %arg11: memref<1x128xf32, #tpu.memory_space<vmem>>, %arg12: memref<1x128xf32, #tpu.memory_space<vmem>>, %arg13: memref<1x8x256xf32, #tpu.memory_space<vmem>>, %arg14: memref<1x8x16xf32, #tpu.memory_space<vmem>>, %arg15: memref<4x16x64xf32, #tpu.memory_space<vmem>>, %arg16: memref<16x128xf32, #tpu.memory_space<vmem>>) attributes {dimension_semantics = [#tpu.dimension_semantics<parallel>, #tpu.dimension_semantics<arbitrary>], iteration_bounds = array<i64: 2, 2>, scalar_prefetch = 0 : i64, scratch_operands = 2 : i64, tpu.core_type = #tpu.core_type<tc>, window_params = [{transform_indices = @transform_0, window_bounds = array<i64: 1, 1, 16>}, {transform_indices = @transform_1, window_bounds = array<i64: 1, 8, 256>}, {transform_indices = @transform_2, window_bounds = array<i64: 1, 16, 256>}, {transform_indices = @transform_3, window_bounds = array<i64: 1, 8, 128>}, {transform_indices = @transform_4, window_bounds = array<i64: 1, 16, 128>}, {pipeline_mode = #tpu.pipeline_mode<synchronous>, transform_indices = @transform_5, window_bounds = array<i64: 4, 256, 64>}, {pipeline_mode = #tpu.pipeline_mode<synchronous>, transform_indices = @transform_6, window_bounds = array<i64: 4, 1, 64>}, {pipeline_mode = #tpu.pipeline_mode<synchronous>, transform_indices = @transform_7, window_bounds = array<i64: 4, 256, 64>}, {pipeline_mode = #tpu.pipeline_mode<synchronous>, transform_indices = @transform_8, window_bounds = array<i64: 4, 1, 64>}, {pipeline_mode = #tpu.pipeline_mode<synchronous>, transform_indices = @transform_9, window_bounds = array<i64: 1, 128>}, {pipeline_mode = #tpu.pipeline_mode<synchronous>, transform_indices = @transform_10, window_bounds = array<i64: 1, 128>}, {transform_indices = @transform_11, window_bounds = array<i64: 1, 8, 256>}, {transform_indices = @transform_12, window_bounds = array<i64: 1, 8, 16>}]} {
    %c0_i32 = arith.constant 0 : i32
    %0 = arith.cmpi eq, %arg1, %c0_i32 : i32
    %1 = arith.extui %0 : i1 to i32
    %c0_i32_0 = arith.constant 0 : i32
    %2 = arith.cmpi ne, %1, %c0_i32_0 : i32
    scf.if %2 {
      %c0_65 = arith.constant 0 : index
      %c0_66 = arith.constant 0 : index
      %c0_67 = arith.constant 0 : index
      %93 = vector.load %arg4[%c0_65, %c0_66, %c0_67] : memref<1x16x256xf32, #tpu.memory_space<vmem>>, vector<1x16x256xf32>
      %94 = vector.shape_cast %93 : vector<1x16x256xf32> to vector<16x256xf32>
      %c0_68 = arith.constant 0 : index
      %c0_69 = arith.constant 0 : index
      %c0_70 = arith.constant 0 : index
      %95 = vector.load %arg9[%c0_68, %c0_69, %c0_70] : memref<4x256x64xf32, #tpu.memory_space<vmem>>, vector<1x256x64xf32>
      %96 = vector.shape_cast %95 : vector<1x256x64xf32> to vector<256x64xf32>
      %cst_71 = arith.constant dense<0.000000e+00> : vector<16x64xf32>
      %97 = tpu.matmul %94, %96, %cst_71 {dimension_numbers = #tpu.dot_dimension_numbers<[1], [0], [0], [1], [0, 0, 1, 1], [], []>} : vector<16x256xf32>, vector<256x64xf32>, vector<16x64xf32> -> vector<16x64xf32>
      %c0_72 = arith.constant 0 : index
      %c0_73 = arith.constant 0 : index
      %c0_74 = arith.constant 0 : index
      %98 = vector.load %arg10[%c0_72, %c0_73, %c0_74] : memref<4x1x64xf32, #tpu.memory_space<vmem>>, vector<1x1x64xf32>
      %99 = vector.shape_cast %98 : vector<1x1x64xf32> to vector<1x64xf32>
      %100 = vector.broadcast %99 : vector<1x64xf32> to vector<16x64xf32>
      %101 = arith.addf %97, %100 : vector<16x64xf32>
      %c0_75 = arith.constant 0 : index
      %c0_76 = arith.constant 0 : index
      %c0_77 = arith.constant 0 : index
      %102 = vector.load %arg15[%c0_75, %c0_76, %c0_77] : memref<4x16x64xf32, #tpu.memory_space<vmem>>, vector<1x16x64xf32>
      %103 = vector.shape_cast %102 : vector<1x16x64xf32> to vector<16x64xf32>
      %104 = vector.shape_cast %101 : vector<16x64xf32> to vector<1x16x64xf32>
      tpu.vector_store %arg15[%c0_75, %c0_76, %c0_77], %104 {strides = array<i32>} : memref<4x16x64xf32, #tpu.memory_space<vmem>>, vector<1x16x64xf32>,
      %c1_78 = arith.constant 1 : index
      %c0_79 = arith.constant 0 : index
      %c0_80 = arith.constant 0 : index
      %105 = vector.load %arg9[%c1_78, %c0_79, %c0_80] : memref<4x256x64xf32, #tpu.memory_space<vmem>>, vector<1x256x64xf32>
      %106 = vector.shape_cast %105 : vector<1x256x64xf32> to vector<256x64xf32>
      %cst_81 = arith.constant dense<0.000000e+00> : vector<16x64xf32>
      %107 = tpu.matmul %94, %106, %cst_81 {dimension_numbers = #tpu.dot_dimension_numbers<[1], [0], [0], [1], [0, 0, 1, 1], [], []>} : vector<16x256xf32>, vector<256x64xf32>, vector<16x64xf32> -> vector<16x64xf32>
      %c1_82 = arith.constant 1 : index
      %c0_83 = arith.constant 0 : index
      %c0_84 = arith.constant 0 : index
      %108 = vector.load %arg10[%c1_82, %c0_83, %c0_84] : memref<4x1x64xf32, #tpu.memory_space<vmem>>, vector<1x1x64xf32>
      %109 = vector.shape_cast %108 : vector<1x1x64xf32> to vector<1x64xf32>
      %110 = vector.broadcast %109 : vector<1x64xf32> to vector<16x64xf32>
      %111 = arith.addf %107, %110 : vector<16x64xf32>
      %c1_85 = arith.constant 1 : index
      %c0_86 = arith.constant 0 : index
      %c0_87 = arith.constant 0 : index
      %112 = vector.load %arg15[%c1_85, %c0_86, %c0_87] : memref<4x16x64xf32, #tpu.memory_space<vmem>>, vector<1x16x64xf32>
      %113 = vector.shape_cast %112 : vector<1x16x64xf32> to vector<16x64xf32>
      %114 = vector.shape_cast %111 : vector<16x64xf32> to vector<1x16x64xf32>
      tpu.vector_store %arg15[%c1_85, %c0_86, %c0_87], %114 {strides = array<i32>} : memref<4x16x64xf32, #tpu.memory_space<vmem>>, vector<1x16x64xf32>,
      %c2_88 = arith.constant 2 : index
      %c0_89 = arith.constant 0 : index
      %c0_90 = arith.constant 0 : index
      %115 = vector.load %arg9[%c2_88, %c0_89, %c0_90] : memref<4x256x64xf32, #tpu.memory_space<vmem>>, vector<1x256x64xf32>
      %116 = vector.shape_cast %115 : vector<1x256x64xf32> to vector<256x64xf32>
      %cst_91 = arith.constant dense<0.000000e+00> : vector<16x64xf32>
      %117 = tpu.matmul %94, %116, %cst_91 {dimension_numbers = #tpu.dot_dimension_numbers<[1], [0], [0], [1], [0, 0, 1, 1], [], []>} : vector<16x256xf32>, vector<256x64xf32>, vector<16x64xf32> -> vector<16x64xf32>
      %c2_92 = arith.constant 2 : index
      %c0_93 = arith.constant 0 : index
      %c0_94 = arith.constant 0 : index
      %118 = vector.load %arg10[%c2_92, %c0_93, %c0_94] : memref<4x1x64xf32, #tpu.memory_space<vmem>>, vector<1x1x64xf32>
      %119 = vector.shape_cast %118 : vector<1x1x64xf32> to vector<1x64xf32>
      %120 = vector.broadcast %119 : vector<1x64xf32> to vector<16x64xf32>
      %121 = arith.addf %117, %120 : vector<16x64xf32>
      %c2_95 = arith.constant 2 : index
      %c0_96 = arith.constant 0 : index
      %c0_97 = arith.constant 0 : index
      %122 = vector.load %arg15[%c2_95, %c0_96, %c0_97] : memref<4x16x64xf32, #tpu.memory_space<vmem>>, vector<1x16x64xf32>
      %123 = vector.shape_cast %122 : vector<1x16x64xf32> to vector<16x64xf32>
      %124 = vector.shape_cast %121 : vector<16x64xf32> to vector<1x16x64xf32>
      tpu.vector_store %arg15[%c2_95, %c0_96, %c0_97], %124 {strides = array<i32>} : memref<4x16x64xf32, #tpu.memory_space<vmem>>, vector<1x16x64xf32>,
      %c3_98 = arith.constant 3 : index
      %c0_99 = arith.constant 0 : index
      %c0_100 = arith.constant 0 : index
      %125 = vector.load %arg9[%c3_98, %c0_99, %c0_100] : memref<4x256x64xf32, #tpu.memory_space<vmem>>, vector<1x256x64xf32>
      %126 = vector.shape_cast %125 : vector<1x256x64xf32> to vector<256x64xf32>
      %cst_101 = arith.constant dense<0.000000e+00> : vector<16x64xf32>
      %127 = tpu.matmul %94, %126, %cst_101 {dimension_numbers = #tpu.dot_dimension_numbers<[1], [0], [0], [1], [0, 0, 1, 1], [], []>} : vector<16x256xf32>, vector<256x64xf32>, vector<16x64xf32> -> vector<16x64xf32>
      %c3_102 = arith.constant 3 : index
      %c0_103 = arith.constant 0 : index
      %c0_104 = arith.constant 0 : index
      %128 = vector.load %arg10[%c3_102, %c0_103, %c0_104] : memref<4x1x64xf32, #tpu.memory_space<vmem>>, vector<1x1x64xf32>
      %129 = vector.shape_cast %128 : vector<1x1x64xf32> to vector<1x64xf32>
      %130 = vector.broadcast %129 : vector<1x64xf32> to vector<16x64xf32>
      %131 = arith.addf %127, %130 : vector<16x64xf32>
      %c3_105 = arith.constant 3 : index
      %c0_106 = arith.constant 0 : index
      %c0_107 = arith.constant 0 : index
      %132 = vector.load %arg15[%c3_105, %c0_106, %c0_107] : memref<4x16x64xf32, #tpu.memory_space<vmem>>, vector<1x16x64xf32>
      %133 = vector.shape_cast %132 : vector<1x16x64xf32> to vector<16x64xf32>
      %134 = vector.shape_cast %131 : vector<16x64xf32> to vector<1x16x64xf32>
      tpu.vector_store %arg15[%c3_105, %c0_106, %c0_107], %134 {strides = array<i32>} : memref<4x16x64xf32, #tpu.memory_space<vmem>>, vector<1x16x64xf32>,
      %c0_108 = arith.constant 0 : index
      %c0_109 = arith.constant 0 : index
      %c0_110 = arith.constant 0 : index
      %135 = vector.load %arg6[%c0_108, %c0_109, %c0_110] : memref<1x16x128xf32, #tpu.memory_space<vmem>>, vector<1x16x128xf32>
      %136 = vector.shape_cast %135 : vector<1x16x128xf32> to vector<16x128xf32>
      %cst_111 = arith.constant dense<0.000000e+00> : vector<16xf32>
      %137 = vector.multi_reduction <add>, %136, %cst_111 [1] : vector<16x128xf32> to vector<16xf32>
      %138 = vector.shape_cast %137 : vector<16xf32> to vector<16x1xf32>
      %cst_112 = arith.constant 1.280000e+02 : f32
      %139 = vector.broadcast %cst_112 : f32 to vector<16x1xf32>
      %140 = arith.divf %138, %139 : vector<16x1xf32>
      %141 = vector.broadcast %140 : vector<16x1xf32> to vector<16x128xf32>
      %142 = arith.subf %136, %141 : vector<16x128xf32>
      %143 = arith.mulf %142, %142 : vector<16x128xf32>
      %cst_113 = arith.constant dense<0.000000e+00> : vector<16xf32>
      %144 = vector.multi_reduction <add>, %143, %cst_113 [1] : vector<16x128xf32> to vector<16xf32>
      %145 = vector.shape_cast %144 : vector<16xf32> to vector<16x1xf32>
      %cst_114 = arith.constant 1.280000e+02 : f32
      %146 = vector.broadcast %cst_114 : f32 to vector<16x1xf32>
      %147 = arith.divf %145, %146 : vector<16x1xf32>
      %cst_115 = arith.constant 9.99999974E-6 : f32
      %148 = vector.broadcast %cst_115 : f32 to vector<16x1xf32>
      %149 = arith.addf %147, %148 : vector<16x1xf32>
      %150 = math.rsqrt %149 : vector<16x1xf32>
      %151 = vector.broadcast %150 : vector<16x1xf32> to vector<16x128xf32>
      %152 = arith.mulf %142, %151 : vector<16x128xf32>
      %c0_116 = arith.constant 0 : index
      %c0_117 = arith.constant 0 : index
      %153 = vector.load %arg11[%c0_116, %c0_117] : memref<1x128xf32, #tpu.memory_space<vmem>>, vector<1x128xf32>
      %154 = vector.broadcast %153 : vector<1x128xf32> to vector<16x128xf32>
      %155 = arith.mulf %152, %154 : vector<16x128xf32>
      %c0_118 = arith.constant 0 : index
      %c0_119 = arith.constant 0 : index
      %156 = vector.load %arg12[%c0_118, %c0_119] : memref<1x128xf32, #tpu.memory_space<vmem>>, vector<1x128xf32>
      %157 = vector.broadcast %156 : vector<1x128xf32> to vector<16x128xf32>
      %158 = arith.addf %155, %157 : vector<16x128xf32>
      %c0_120 = arith.constant 0 : index
      %c0_121 = arith.constant 0 : index
      %159 = vector.load %arg16[%c0_120, %c0_121] : memref<16x128xf32, #tpu.memory_space<vmem>>, vector<16x128xf32>
      tpu.vector_store %arg16[%c0_120, %c0_121], %158 {strides = array<i32>} : memref<16x128xf32, #tpu.memory_space<vmem>>, vector<16x128xf32>,
    } else {
    }
    %c0 = arith.constant 0 : index
    %c0_1 = arith.constant 0 : index
    %c0_2 = arith.constant 0 : index
    %3 = vector.load %arg3[%c0, %c0_1, %c0_2] : memref<1x8x256xf32, #tpu.memory_space<vmem>>, vector<1x8x256xf32>
    %4 = vector.shape_cast %3 : vector<1x8x256xf32> to vector<8x256xf32>
    %c0_3 = arith.constant 0 : index
    %c0_4 = arith.constant 0 : index
    %c0_5 = arith.constant 0 : index
    %5 = vector.load %arg7[%c0_3, %c0_4, %c0_5] : memref<4x256x64xf32, #tpu.memory_space<vmem>>, vector<1x256x64xf32>
    %6 = vector.shape_cast %5 : vector<1x256x64xf32> to vector<256x64xf32>
    %cst = arith.constant dense<0.000000e+00> : vector<8x64xf32>
    %7 = tpu.matmul %4, %6, %cst {dimension_numbers = #tpu.dot_dimension_numbers<[1], [0], [0], [1], [0, 0, 1, 1], [], []>} : vector<8x256xf32>, vector<256x64xf32>, vector<8x64xf32> -> vector<8x64xf32>
    %c0_6 = arith.constant 0 : index
    %c0_7 = arith.constant 0 : index
    %c0_8 = arith.constant 0 : index
    %8 = vector.load %arg8[%c0_6, %c0_7, %c0_8] : memref<4x1x64xf32, #tpu.memory_space<vmem>>, vector<1x1x64xf32>
    %9 = vector.shape_cast %8 : vector<1x1x64xf32> to vector<1x64xf32>
    %10 = vector.broadcast %9 : vector<1x64xf32> to vector<8x64xf32>
    %11 = arith.addf %7, %10 : vector<8x64xf32>
    %c0_9 = arith.constant 0 : index
    %c0_10 = arith.constant 0 : index
    %c0_11 = arith.constant 0 : index
    %12 = vector.load %arg15[%c0_9, %c0_10, %c0_11] : memref<4x16x64xf32, #tpu.memory_space<vmem>>, vector<1x16x64xf32>
    %13 = vector.shape_cast %12 : vector<1x16x64xf32> to vector<16x64xf32>
    %cst_12 = arith.constant dense<0.000000e+00> : vector<8x16xf32>
    %14 = tpu.matmul %11, %13, %cst_12 {dimension_numbers = #tpu.dot_dimension_numbers<[1], [1], [0], [0], [0, 0, 1, 0], [], []>} : vector<8x64xf32>, vector<16x64xf32>, vector<8x16xf32> -> vector<8x16xf32>
    %c1 = arith.constant 1 : index
    %c0_13 = arith.constant 0 : index
    %c0_14 = arith.constant 0 : index
    %15 = vector.load %arg7[%c1, %c0_13, %c0_14] : memref<4x256x64xf32, #tpu.memory_space<vmem>>, vector<1x256x64xf32>
    %16 = vector.shape_cast %15 : vector<1x256x64xf32> to vector<256x64xf32>
    %cst_15 = arith.constant dense<0.000000e+00> : vector<8x64xf32>
    %17 = tpu.matmul %4, %16, %cst_15 {dimension_numbers = #tpu.dot_dimension_numbers<[1], [0], [0], [1], [0, 0, 1, 1], [], []>} : vector<8x256xf32>, vector<256x64xf32>, vector<8x64xf32> -> vector<8x64xf32>
    %c1_16 = arith.constant 1 : index
    %c0_17 = arith.constant 0 : index
    %c0_18 = arith.constant 0 : index
    %18 = vector.load %arg8[%c1_16, %c0_17, %c0_18] : memref<4x1x64xf32, #tpu.memory_space<vmem>>, vector<1x1x64xf32>
    %19 = vector.shape_cast %18 : vector<1x1x64xf32> to vector<1x64xf32>
    %20 = vector.broadcast %19 : vector<1x64xf32> to vector<8x64xf32>
    %21 = arith.addf %17, %20 : vector<8x64xf32>
    %c1_19 = arith.constant 1 : index
    %c0_20 = arith.constant 0 : index
    %c0_21 = arith.constant 0 : index
    %22 = vector.load %arg15[%c1_19, %c0_20, %c0_21] : memref<4x16x64xf32, #tpu.memory_space<vmem>>, vector<1x16x64xf32>
    %23 = vector.shape_cast %22 : vector<1x16x64xf32> to vector<16x64xf32>
    %cst_22 = arith.constant dense<0.000000e+00> : vector<8x16xf32>
    %24 = tpu.matmul %21, %23, %cst_22 {dimension_numbers = #tpu.dot_dimension_numbers<[1], [1], [0], [0], [0, 0, 1, 0], [], []>} : vector<8x64xf32>, vector<16x64xf32>, vector<8x16xf32> -> vector<8x16xf32>
    %25 = arith.maximumf %14, %24 : vector<8x16xf32>
    %c2 = arith.constant 2 : index
    %c0_23 = arith.constant 0 : index
    %c0_24 = arith.constant 0 : index
    %26 = vector.load %arg7[%c2, %c0_23, %c0_24] : memref<4x256x64xf32, #tpu.memory_space<vmem>>, vector<1x256x64xf32>
    %27 = vector.shape_cast %26 : vector<1x256x64xf32> to vector<256x64xf32>
    %cst_25 = arith.constant dense<0.000000e+00> : vector<8x64xf32>
    %28 = tpu.matmul %4, %27, %cst_25 {dimension_numbers = #tpu.dot_dimension_numbers<[1], [0], [0], [1], [0, 0, 1, 1], [], []>} : vector<8x256xf32>, vector<256x64xf32>, vector<8x64xf32> -> vector<8x64xf32>
    %c2_26 = arith.constant 2 : index
    %c0_27 = arith.constant 0 : index
    %c0_28 = arith.constant 0 : index
    %29 = vector.load %arg8[%c2_26, %c0_27, %c0_28] : memref<4x1x64xf32, #tpu.memory_space<vmem>>, vector<1x1x64xf32>
    %30 = vector.shape_cast %29 : vector<1x1x64xf32> to vector<1x64xf32>
    %31 = vector.broadcast %30 : vector<1x64xf32> to vector<8x64xf32>
    %32 = arith.addf %28, %31 : vector<8x64xf32>
    %c2_29 = arith.constant 2 : index
    %c0_30 = arith.constant 0 : index
    %c0_31 = arith.constant 0 : index
    %33 = vector.load %arg15[%c2_29, %c0_30, %c0_31] : memref<4x16x64xf32, #tpu.memory_space<vmem>>, vector<1x16x64xf32>
    %34 = vector.shape_cast %33 : vector<1x16x64xf32> to vector<16x64xf32>
    %cst_32 = arith.constant dense<0.000000e+00> : vector<8x16xf32>
    %35 = tpu.matmul %32, %34, %cst_32 {dimension_numbers = #tpu.dot_dimension_numbers<[1], [1], [0], [0], [0, 0, 1, 0], [], []>} : vector<8x64xf32>, vector<16x64xf32>, vector<8x16xf32> -> vector<8x16xf32>
    %36 = arith.maximumf %25, %35 : vector<8x16xf32>
    %c3 = arith.constant 3 : index
    %c0_33 = arith.constant 0 : index
    %c0_34 = arith.constant 0 : index
    %37 = vector.load %arg7[%c3, %c0_33, %c0_34] : memref<4x256x64xf32, #tpu.memory_space<vmem>>, vector<1x256x64xf32>
    %38 = vector.shape_cast %37 : vector<1x256x64xf32> to vector<256x64xf32>
    %cst_35 = arith.constant dense<0.000000e+00> : vector<8x64xf32>
    %39 = tpu.matmul %4, %38, %cst_35 {dimension_numbers = #tpu.dot_dimension_numbers<[1], [0], [0], [1], [0, 0, 1, 1], [], []>} : vector<8x256xf32>, vector<256x64xf32>, vector<8x64xf32> -> vector<8x64xf32>
    %c3_36 = arith.constant 3 : index
    %c0_37 = arith.constant 0 : index
    %c0_38 = arith.constant 0 : index
    %40 = vector.load %arg8[%c3_36, %c0_37, %c0_38] : memref<4x1x64xf32, #tpu.memory_space<vmem>>, vector<1x1x64xf32>
    %41 = vector.shape_cast %40 : vector<1x1x64xf32> to vector<1x64xf32>
    %42 = vector.broadcast %41 : vector<1x64xf32> to vector<8x64xf32>
    %43 = arith.addf %39, %42 : vector<8x64xf32>
    %c3_39 = arith.constant 3 : index
    %c0_40 = arith.constant 0 : index
    %c0_41 = arith.constant 0 : index
    %44 = vector.load %arg15[%c3_39, %c0_40, %c0_41] : memref<4x16x64xf32, #tpu.memory_space<vmem>>, vector<1x16x64xf32>
    %45 = vector.shape_cast %44 : vector<1x16x64xf32> to vector<16x64xf32>
    %cst_42 = arith.constant dense<0.000000e+00> : vector<8x16xf32>
    %46 = tpu.matmul %43, %45, %cst_42 {dimension_numbers = #tpu.dot_dimension_numbers<[1], [1], [0], [0], [0, 0, 1, 0], [], []>} : vector<8x64xf32>, vector<16x64xf32>, vector<8x16xf32> -> vector<8x16xf32>
    %47 = arith.maximumf %36, %46 : vector<8x16xf32>
    %c8_i32 = arith.constant 8 : i32
    %48 = arith.muli %arg1, %c8_i32 : i32
    %49 = tpu.iota {dimensions = array<i32: 0>} : vector<8x16xi32>
    %50 = vector.broadcast %48 : i32 to vector<8x16xi32>
    %51 = arith.addi %50, %49 : vector<8x16xi32>
    %52 = tpu.iota {dimensions = array<i32: 1>} : vector<8x16xi32>
    %53 = arith.subi %51, %52 : vector<8x16xi32>
    %54 = math.absi %53 : vector<8x16xi32>
    %c3_i32 = arith.constant 3 : i32
    %55 = vector.broadcast %c3_i32 : i32 to vector<8x16xi32>
    %56 = arith.cmpi sle, %54, %55 : vector<8x16xi32>
    %c0_43 = arith.constant 0 : index
    %c0_44 = arith.constant 0 : index
    %c0_45 = arith.constant 0 : index
    %57 = vector.load %arg2[%c0_43, %c0_44, %c0_45] : memref<1x1x16xf32, #tpu.memory_space<vmem>>, vector<1x1x16xf32>
    %58 = vector.shape_cast %57 : vector<1x1x16xf32> to vector<1x16xf32>
    %cst_46 = arith.constant 0.000000e+00 : f32
    %59 = vector.broadcast %cst_46 : f32 to vector<1x16xf32>
    %60 = arith.cmpf ogt, %58, %59 : vector<1x16xf32>
    %61 = vector.broadcast %60 : vector<1x16xi1> to vector<8x16xi1>
    %62 = arith.andi %56, %61 : vector<8x16xi1>
    %cst_47 = arith.constant 1.000000e+04 : f32
    %63 = vector.broadcast %cst_47 : f32 to vector<8x16xf32>
    %64 = arith.subf %47, %63 : vector<8x16xf32>
    %65 = arith.select %62, %47, %64 : vector<8x16xi1>, vector<8x16xf32>
    %cst_48 = arith.constant dense<0xFF800000> : vector<8xf32>
    %66 = vector.multi_reduction <maximumf>, %65, %cst_48 [1] : vector<8x16xf32> to vector<8xf32>
    %67 = vector.shape_cast %66 : vector<8xf32> to vector<8x1xf32>
    %68 = vector.broadcast %67 : vector<8x1xf32> to vector<8x16xf32>
    %69 = arith.subf %65, %68 : vector<8x16xf32>
    %70 = math.exp %69 : vector<8x16xf32>
    %cst_49 = arith.constant dense<0.000000e+00> : vector<8xf32>
    %71 = vector.multi_reduction <add>, %70, %cst_49 [1] : vector<8x16xf32> to vector<8xf32>
    %72 = vector.shape_cast %71 : vector<8xf32> to vector<8x1xf32>
    %73 = tpu.reciprocal %72 {approx = true} : vector<8x1xf32> -> vector<8x1xf32>
    %74 = arith.mulf %72, %73 : vector<8x1xf32>
    %cst_50 = arith.constant 2.000000e+00 : f32
    %75 = vector.broadcast %cst_50 : f32 to vector<8x1xf32>
    %76 = arith.subf %75, %74 : vector<8x1xf32>
    %77 = arith.mulf %73, %76 : vector<8x1xf32>
    %78 = vector.broadcast %77 : vector<8x1xf32> to vector<8x16xf32>
    %79 = arith.mulf %70, %78 : vector<8x16xf32>
    %c0_51 = arith.constant 0 : index
    %c0_52 = arith.constant 0 : index
    %80 = vector.load %arg16[%c0_51, %c0_52] : memref<16x128xf32, #tpu.memory_space<vmem>>, vector<16x128xf32>
    %cst_53 = arith.constant dense<0.000000e+00> : vector<8x128xf32>
    %81 = tpu.matmul %79, %80, %cst_53 {dimension_numbers = #tpu.dot_dimension_numbers<[1], [0], [0], [1], [0, 0, 1, 1], [], []>} : vector<8x16xf32>, vector<16x128xf32>, vector<8x128xf32> -> vector<8x128xf32>
    %c0_54 = arith.constant 0 : index
    %c0_55 = arith.constant 0 : index
    %c0_56 = arith.constant 0 : index
    %82 = vector.load %arg5[%c0_54, %c0_55, %c0_56] : memref<1x8x128xf32, #tpu.memory_space<vmem>>, vector<1x8x128xf32>
    %83 = vector.shape_cast %82 : vector<1x8x128xf32> to vector<8x128xf32>
    %c0_57 = arith.constant 0 : index
    %c0_58 = arith.constant 0 : index
    %c0_59 = arith.constant 0 : index
    %84 = vector.load %arg13[%c0_57, %c0_58, %c0_59] : memref<1x8x256xf32, #tpu.memory_space<vmem>>, vector<1x8x128xf32>
    %85 = vector.shape_cast %84 : vector<1x8x128xf32> to vector<8x128xf32>
    %86 = vector.shape_cast %83 : vector<8x128xf32> to vector<1x8x128xf32>
    tpu.vector_store %arg13[%c0_57, %c0_58, %c0_59], %86 {strides = array<i32>} : memref<1x8x256xf32, #tpu.memory_space<vmem>>, vector<1x8x128xf32>,
    %c0_60 = arith.constant 0 : index
    %c0_61 = arith.constant 0 : index
    %c128 = arith.constant 128 : index
    %87 = vector.load %arg13[%c0_60, %c0_61, %c128] : memref<1x8x256xf32, #tpu.memory_space<vmem>>, vector<1x8x128xf32>
    %88 = vector.shape_cast %87 : vector<1x8x128xf32> to vector<8x128xf32>
    %89 = vector.shape_cast %81 : vector<8x128xf32> to vector<1x8x128xf32>
    tpu.vector_store %arg13[%c0_60, %c0_61, %c128], %89 {strides = array<i32>} : memref<1x8x256xf32, #tpu.memory_space<vmem>>, vector<1x8x128xf32>,
    %c0_62 = arith.constant 0 : index
    %c0_63 = arith.constant 0 : index
    %c0_64 = arith.constant 0 : index
    %90 = vector.load %arg14[%c0_62, %c0_63, %c0_64] : memref<1x8x16xf32, #tpu.memory_space<vmem>>, vector<1x8x16xf32>
    %91 = vector.shape_cast %90 : vector<1x8x16xf32> to vector<8x16xf32>
    %92 = vector.shape_cast %79 : vector<8x16xf32> to vector<1x8x16xf32>
    tpu.vector_store %arg14[%c0_62, %c0_63, %c0_64], %92 {strides = array<i32>} : memref<1x8x16xf32, #tpu.memory_space<vmem>>, vector<1x8x16xf32>,
    return
  }
  func.func @transform_0(%arg0: i32, %arg1: i32) -> (i32, i32, i32) {
    %c0_i32 = arith.constant 0 : i32
    %c0_i32_0 = arith.constant 0 : i32
    %c0_i32_1 = arith.constant 0 : i32
    return %arg0, %c0_i32, %c0_i32_0 : i32, i32, i32
  }
  func.func @transform_1(%arg0: i32, %arg1: i32) -> (i32, i32, i32) {
    %c0_i32 = arith.constant 0 : i32
    %c0_i32_0 = arith.constant 0 : i32
    return %arg0, %arg1, %c0_i32 : i32, i32, i32
  }
  func.func @transform_2(%arg0: i32, %arg1: i32) -> (i32, i32, i32) {
    %c0_i32 = arith.constant 0 : i32
    %c0_i32_0 = arith.constant 0 : i32
    %c0_i32_1 = arith.constant 0 : i32
    return %arg0, %c0_i32, %c0_i32_0 : i32, i32, i32
  }
  func.func @transform_3(%arg0: i32, %arg1: i32) -> (i32, i32, i32) {
    %c0_i32 = arith.constant 0 : i32
    %c0_i32_0 = arith.constant 0 : i32
    return %arg0, %arg1, %c0_i32 : i32, i32, i32
  }
  func.func @transform_4(%arg0: i32, %arg1: i32) -> (i32, i32, i32) {
    %c0_i32 = arith.constant 0 : i32
    %c1_i32 = arith.constant 1 : i32
    %c0_i32_0 = arith.constant 0 : i32
    return %arg0, %c0_i32, %c1_i32 : i32, i32, i32
  }
  func.func @transform_5(%arg0: i32, %arg1: i32) -> (i32, i32, i32) {
    %c0_i32 = arith.constant 0 : i32
    %c0_i32_0 = arith.constant 0 : i32
    %c0_i32_1 = arith.constant 0 : i32
    %c0_i32_2 = arith.constant 0 : i32
    return %c0_i32, %c0_i32_0, %c0_i32_1 : i32, i32, i32
  }
  func.func @transform_6(%arg0: i32, %arg1: i32) -> (i32, i32, i32) {
    %c0_i32 = arith.constant 0 : i32
    %c0_i32_0 = arith.constant 0 : i32
    %c0_i32_1 = arith.constant 0 : i32
    %c0_i32_2 = arith.constant 0 : i32
    return %c0_i32, %c0_i32_0, %c0_i32_1 : i32, i32, i32
  }
  func.func @transform_7(%arg0: i32, %arg1: i32) -> (i32, i32, i32) {
    %c0_i32 = arith.constant 0 : i32
    %c0_i32_0 = arith.constant 0 : i32
    %c0_i32_1 = arith.constant 0 : i32
    %c0_i32_2 = arith.constant 0 : i32
    return %c0_i32, %c0_i32_0, %c0_i32_1 : i32, i32, i32
  }
  func.func @transform_8(%arg0: i32, %arg1: i32) -> (i32, i32, i32) {
    %c0_i32 = arith.constant 0 : i32
    %c0_i32_0 = arith.constant 0 : i32
    %c0_i32_1 = arith.constant 0 : i32
    %c0_i32_2 = arith.constant 0 : i32
    return %c0_i32, %c0_i32_0, %c0_i32_1 : i32, i32, i32
  }
  func.func @transform_9(%arg0: i32, %arg1: i32) -> (i32, i32) {
    %c0_i32 = arith.constant 0 : i32
    %c0_i32_0 = arith.constant 0 : i32
    %c0_i32_1 = arith.constant 0 : i32
    return %c0_i32, %c0_i32_0 : i32, i32
  }
  func.func @transform_10(%arg0: i32, %arg1: i32) -> (i32, i32) {
    %c0_i32 = arith.constant 0 : i32
    %c0_i32_0 = arith.constant 0 : i32
    %c0_i32_1 = arith.constant 0 : i32
    return %c0_i32, %c0_i32_0 : i32, i32
  }
  func.func @transform_11(%arg0: i32, %arg1: i32) -> (i32, i32, i32) {
    %c0_i32 = arith.constant 0 : i32
    %c0_i32_0 = arith.constant 0 : i32
    return %arg0, %arg1, %c0_i32 : i32, i32, i32
  }
  func.func @transform_12(%arg0: i32, %arg1: i32) -> (i32, i32, i32) {
    %c0_i32 = arith.constant 0 : i32
    %c0_i32_0 = arith.constant 0 : i32
    return %arg0, %arg1, %c0_i32 : i32, i32, i32
  }
}

</mosaic_0001>

<llo_original>
// kernel: tpu_custom_call.1
$region0: #{tpu_custom_call.1}
  #allocation0 [shape = 'u32[]', space=smem, size = 0x4, offset = 0x4, fixed_abs, tag = 'smem constant byte address 0x4 - core index']
  #allocation1 [shape = 'u32[144,128]{1,0:T(1,128)}', space=vmem, size = 0x12000, scoped, tag = 'internal scratch']
  #allocation2 [shape = 'f32[4,16,64]{2,1,0:T(8,128)}', space=vmem, size = 0x8000, scoped, tag = 'scratch operand']
  #allocation3 [shape = 'f32[16,128]{1,0:T(8,128)}', space=vmem, size = 0x2000, scoped, tag = 'scratch operand']
  %s0 = inlined_call_operand.hbm [shape: f32[2,1,16], index: 0, kind: input, shape index: {}]
  %s1 = inlined_call_operand.hbm [shape: f32[2,16,256], index: 1, kind: input, shape index: {}]
  %s2 = inlined_call_operand.hbm [shape: f32[2,16,256], index: 2, kind: input, shape index: {}]
  %s3 = inlined_call_operand.hbm [shape: f32[2,16,256], index: 3, kind: input, shape index: {}]
  %s4 = inlined_call_operand.hbm [shape: f32[2,16,256], index: 4, kind: input, shape index: {}]
  %s5 = inlined_call_operand.hbm [shape: f32[4,256,64], index: 5, kind: input, shape index: {}]
  %s6 = inlined_call_operand.hbm [shape: f32[4,1,64], index: 6, kind: input, shape index: {}]
  %s7 = inlined_call_operand.hbm [shape: f32[4,256,64], index: 7, kind: input, shape index: {}]
  %s8 = inlined_call_operand.hbm [shape: f32[4,1,64], index: 8, kind: input, shape index: {}]
  %s9 = inlined_call_operand.hbm [shape: f32[1,128], index: 9, kind: input, shape index: {}]
  %s10 = inlined_call_operand.hbm [shape: f32[1,128], index: 10, kind: input, shape index: {}]
  %s11 = inlined_call_operand.hbm [shape: f32[2,16,256], index: 11, kind: output, shape index: {0}]
  %s12 = inlined_call_operand.hbm [shape: f32[2,16,16], index: 12, kind: output, shape index: {1}]
  %13 = xla_tuple %s11, %s12
  %s14 = sld [smem:[#allocation0]]
  $region133: #{tpu_custom_call.1} parent=0
    _
  %s16 = ssub.s32 1, %s14
  %s17 = scalar_select 0, %s16, %s14
  $region1: #{tpu_custom_call.1} parent=0
    #allocation4 [shape = 'u8[1024]{0}', space=vmem, size = 0x400, scoped, tag = 'input window, operand 0']
    #allocation5 [shape = 's32[2]{0}', space=sflag, size = 0x8, scoped, tag = 'scoped memory for tpu_custom_call.1']
    #allocation6 [shape = 's32[2]{0}', space=sflag, size = 0x8, scoped, tag = 'scoped memory for tpu_custom_call.1']
    #allocation7 [shape = 'u8[16384]{0}', space=vmem, size = 0x4000, scoped, tag = 'input window, operand 1']
    #allocation8 [shape = 's32[2]{0}', space=sflag, size = 0x8, scoped, tag = 'scoped memory for tpu_custom_call.1']
    #allocation9 [shape = 'u8[32768]{0}', space=vmem, size = 0x8000, scoped, tag = 'input window, operand 2']
    #allocation10 [shape = 'u8[8192]{0}', space=vmem, size = 0x2000, scoped, tag = 'input window, operand 3']
    #allocation11 [shape = 's32[2]{0}', space=sflag, size = 0x8, scoped, tag = 'scoped memory for tpu_custom_call.1']
    #allocation12 [shape = 'u8[16384]{0}', space=vmem, size = 0x4000, scoped, tag = 'input window, operand 4']
    #allocation13 [shape = 'u8[524288]{0}', space=vmem, size = 0x80000, scoped, tag = 'input window, operand 5, single buffered']
    #allocation14 [shape = 's32[1]{0}', space=sflag, size = 0x4, scoped, tag = 'scoped memory for tpu_custom_call.1']
    #allocation15 [shape = 'u8[2048]{0}', space=vmem, size = 0x800, scoped, tag = 'input window, operand 6, single buffered']
    #allocation16 [shape = 'u8[524288]{0}', space=vmem, size = 0x80000, scoped, tag = 'input window, operand 7, single buffered']
    #allocation17 [shape = 's32[1]{0}', space=sflag, size = 0x4, scoped, tag = 'scoped memory for tpu_custom_call.1']
    #allocation18 [shape = 'u8[2048]{0}', space=vmem, size = 0x800, scoped, tag = 'input window, operand 8, single buffered']
    #allocation19 [shape = 'u8[512]{0}', space=vmem, size = 0x400, scoped, tag = 'input window, operand 9, single buffered']
    #allocation20 [shape = 's32[1]{0}', space=sflag, size = 0x4, scoped, tag = 'scoped memory for tpu_custom_call.1']
    #allocation21 [shape = 'u8[512]{0}', space=vmem, size = 0x400, scoped, tag = 'input window, operand 10, single buffered']
    #allocation22 [shape = 'u8[16384]{0}', space=vmem, size = 0x4000, scoped, tag = 'output window, operand 0']
    #allocation23 [shape = 'u8[8192]{0}', space=vmem, size = 0x2000, scoped, tag = 'output window, operand 1']
    #allocation24 [shape = 's32[2]{0}', space=sflag, size = 0x8, scoped, tag = 'scoped memory for tpu_custom_call.1']
    %18 = vsyncpa [#allocation5], 0
    %s19 = scalar_lea.sflag [#allocation5], 1
    %20 = vsyncpa %s19, 0
    %21 = vsyncpa [#allocation8], 0
    %s22 = scalar_lea.sflag [#allocation8], 1
    %23 = vsyncpa %s22, 0
    %24 = vsyncpa [#allocation11], 0
    %s25 = scalar_lea.sflag [#allocation11], 1
    %26 = vsyncpa %s25, 0
    %27 = vsyncpa [#allocation14], 0
    %28 = vsyncpa [#allocation17], 0
    %29 = vsyncpa [#allocation20], 0
    %30 = vsyncpa [#allocation6], 0
    %s31 = scalar_lea.sflag [#allocation6], 1
    %32 = vsyncpa %s31, 0
    %33 = vsyncpa [#allocation24], 0
    %s34 = scalar_lea.sflag [#allocation24], 1
    %35 = vsyncpa %s34, 0
    loop: start=0, step=1, limit=6
    $region2: #{tpu_custom_call.1} parent=1 // loop_pre_header
      _
    $region3: #{tpu_custom_call.1} parent=1 // loop_header
      %s37 = sphi 0, %s41
      %p38 = scmp.ge.s32.totalorder %s37, 6
      %s44 = sphi 0, %s56
      %s45 = sphi 0, %s52
      %s46 = sphi 0, %s44
      %s47 = sphi 0, %s45
      %s48 = sphi 0, %s46
      %s49 = sphi 0, %s47
      %s59 = sphi 0, %s61
      %s62 = sphi 0, %s59
      %s63 = sphi 0, %s62
      %s79 = sphi 0, %s63
      %s87 = sphi 0, %s89
      %s90 = sphi 0, %s87
      %s91 = sphi 0, %s90
      %s107 = sphi 0, %s91
      %s113 = sphi 0, %s115
      %s116 = sphi 0, %s113
      %s117 = sphi 0, %s116
      %s133 = sphi 0, %s117
      %s141 = sphi 0, %s143
      %s144 = sphi 0, %s141
      %s145 = sphi 0, %s144
      %s161 = sphi 0, %s145
      %s167 = sphi 0, %s169
      %s170 = sphi 0, %s167
      %s171 = sphi 0, %s170
      %s187 = sphi 0, %s171
      %s191 = sphi 0, %s191
      %s193 = sphi 0, %s191
      %s194 = sphi 0, %s193
      %s208 = sphi 0, %s194
      %s212 = sphi 0, %s212
      %s214 = sphi 0, %s212
      %s215 = sphi 0, %s214
      %s229 = sphi 0, %s215
      %s233 = sphi 0, %s233
      %s235 = sphi 0, %s233
      %s236 = sphi 0, %s235
      %s250 = sphi 0, %s236
      %s254 = sphi 0, %s254
      %s256 = sphi 0, %s254
      %s257 = sphi 0, %s256
      %s271 = sphi 0, %s257
      %s275 = sphi 0, %s275
      %s277 = sphi 0, %s275
      %s278 = sphi 0, %s277
      %s292 = sphi 0, %s278
      %s296 = sphi 0, %s296
      %s298 = sphi 0, %s296
      %s299 = sphi 0, %s298
      %s313 = sphi 0, %s299
      %s321 = sphi 0, %s323
      %s324 = sphi 0, %s321
      %s325 = sphi 0, %s324
      %s341 = sphi 0, %s325
      %s349 = sphi 0, %s351
      %s352 = sphi 0, %s349
      %s353 = sphi 0, %s352
      %s369 = sphi 0, %s353
    $region4: #{tpu_custom_call.1} parent=1 // loop_header_branch
      %40 = sbr.rel (%p38) target = $region8
    $region5: #{tpu_custom_call.1} parent=1 // loop_body
      %s42 = ssub.s32 %s37, 1
      %s43 = ssub.s32 %s37, 2
      %s50 = sadd.s32 1, %s45
      %p51 = scmp.ge.s32.totalorder %s50, 2
      %s52 = scalar_select %p51, 0, %s50
      %s53 = sadd.s32 1, %s44
      %s54 = scalar_select %p51, %s53, %s44
      %p55 = scmp.ge.s32.totalorder %s54, 2
      %s56 = scalar_select %p55, 0, %s54
      %s57 = ssub.s32 %s44, %s56
      %p58 = scmp.eq.s32.totalorder %s57, 0
      %s60 = sadd.s32 %s59, 1
      %s61 = scalar_select %p58, %s59, %s60
      %p64 = pneg %p58
      %p65 = scmp.eq.s32.totalorder %s37, 3
      %p66 = por %p64, %p65
      %p67 = scmp.ne.s32.totalorder %s59, %s62
      %p68 = scmp.eq.s32.totalorder %s37, 0
      %p69 = por %p67, %p68
      %p70 = scmp.ne.s32.totalorder %s59, %s62
      %p71 = scmp.eq.s32.totalorder %s42, 3
      %p72 = por %p70, %p71
      %p73 = scmp.ne.s32.totalorder %s62, %s63
      %p74 = scmp.eq.s32.totalorder %s42, 0
      %p75 = por %p73, %p74
      %p76 = scmp.ne.s32.totalorder %s62, %s63
      %p77 = scmp.eq.s32.totalorder %s43, 3
      %p78 = por %p76, %p77
      %p80 = scmp.ne.s32.totalorder %s63, %s79
      %p81 = scmp.eq.s32.totalorder %s43, 0
      %p82 = por %p80, %p81
      %s83 = ssub.s32 %s44, %s56
      %s84 = ssub.s32 %s45, %s52
      %s85 = sor.u32 %s83, %s84
      %p86 = scmp.eq.s32.totalorder %s85, 0
      %s88 = sadd.s32 %s87, 1
      %s89 = scalar_select %p86, %s87, %s88
      %p92 = pneg %p86
      %p93 = scmp.eq.s32.totalorder %s37, 3
      %p94 = por %p92, %p93
      %p95 = scmp.ne.s32.totalorder %s87, %s90
      %p96 = scmp.eq.s32.totalorder %s37, 0
      %p97 = por %p95, %p96
      %p98 = scmp.ne.s32.totalorder %s87, %s90
      %p99 = scmp.eq.s32.totalorder %s42, 3
      %p100 = por %p98, %p99
      %p101 = scmp.ne.s32.totalorder %s90, %s91
      %p102 = scmp.eq.s32.totalorder %s42, 0
      %p103 = por %p101, %p102
      %p104 = scmp.ne.s32.totalorder %s90, %s91
      %p105 = scmp.eq.s32.totalorder %s43, 3
      %p106 = por %p104, %p105
      %p108 = scmp.ne.s32.totalorder %s91, %s107
      %p109 = scmp.eq.s32.totalorder %s43, 0
      %p110 = por %p108, %p109
      %s111 = ssub.s32 %s44, %s56
      %p112 = scmp.eq.s32.totalorder %s111, 0
      %s114 = sadd.s32 %s113, 1
      %s115 = scalar_select %p112, %s113, %s114
      %p118 = pneg %p112
      %p119 = scmp.eq.s32.totalorder %s37, 3
      %p120 = por %p118, %p119
      %p121 = scmp.ne.s32.totalorder %s113, %s116
      %p122 = scmp.eq.s32.totalorder %s37, 0
      %p123 = por %p121, %p122
      %p124 = scmp.ne.s32.totalorder %s113, %s116
      %p125 = scmp.eq.s32.totalorder %s42, 3
      %p126 = por %p124, %p125
      %p127 = scmp.ne.s32.totalorder %s116, %s117
      %p128 = scmp.eq.s32.totalorder %s42, 0
      %p129 = por %p127, %p128
      %p130 = scmp.ne.s32.totalorder %s116, %s117
      %p131 = scmp.eq.s32.totalorder %s43, 3
      %p132 = por %p130, %p131
      %p134 = scmp.ne.s32.totalorder %s117, %s133
      %p135 = scmp.eq.s32.totalorder %s43, 0
      %p136 = por %p134, %p135
      %s137 = ssub.s32 %s44, %s56
      %s138 = ssub.s32 %s45, %s52
      %s139 = sor.u32 %s137, %s138
      %p140 = scmp.eq.s32.totalorder %s139, 0
      %s142 = sadd.s32 %s141, 1
      %s143 = scalar_select %p140, %s141, %s142
      %p146 = pneg %p140
      %p147 = scmp.eq.s32.totalorder %s37, 3
      %p148 = por %p146, %p147
      %p149 = scmp.ne.s32.totalorder %s141, %s144
      %p150 = scmp.eq.s32.totalorder %s37, 0
      %p151 = por %p149, %p150
      %p152 = scmp.ne.s32.totalorder %s141, %s144
      %p153 = scmp.eq.s32.totalorder %s42, 3
      %p154 = por %p152, %p153
      %p155 = scmp.ne.s32.totalorder %s144, %s145
      %p156 = scmp.eq.s32.totalorder %s42, 0
      %p157 = por %p155, %p156
      %p158 = scmp.ne.s32.totalorder %s144, %s145
      %p159 = scmp.eq.s32.totalorder %s43, 3
      %p160 = por %p158, %p159
      %p162 = scmp.ne.s32.totalorder %s145, %s161
      %p163 = scmp.eq.s32.totalorder %s43, 0
      %p164 = por %p162, %p163
      %s165 = ssub.s32 %s44, %s56
      %p166 = scmp.eq.s32.totalorder %s165, 0
      %s168 = sadd.s32 %s167, 1
      %s169 = scalar_select %p166, %s167, %s168
      %p172 = pneg %p166
      %p173 = scmp.eq.s32.totalorder %s37, 3
      %p174 = por %p172, %p173
      %p175 = scmp.ne.s32.totalorder %s167, %s170
      %p176 = scmp.eq.s32.totalorder %s37, 0
      %p177 = por %p175, %p176
      %p178 = scmp.ne.s32.totalorder %s167, %s170
      %p179 = scmp.eq.s32.totalorder %s42, 3
      %p180 = por %p178, %p179
      %p181 = scmp.ne.s32.totalorder %s170, %s171
      %p182 = scmp.eq.s32.totalorder %s42, 0
      %p183 = por %p181, %p182
      %p184 = scmp.ne.s32.totalorder %s170, %s171
      %p185 = scmp.eq.s32.totalorder %s43, 3
      %p186 = por %p184, %p185
      %p188 = scmp.ne.s32.totalorder %s171, %s187
      %p189 = scmp.eq.s32.totalorder %s43, 0
      %p190 = por %p188, %p189
      %s192 = sadd.s32 %s191, 1
      %p195 = scmp.eq.s32.totalorder %s37, 3
      %p196 = scmp.ne.s32.totalorder %s191, %s193
      %p197 = scmp.eq.s32.totalorder %s37, 0
      %p198 = por %p196, %p197
      %p199 = scmp.ne.s32.totalorder %s191, %s193
      %p200 = scmp.eq.s32.totalorder %s42, 3
      %p201 = por %p199, %p200
      %p202 = scmp.ne.s32.totalorder %s193, %s194
      %p203 = scmp.eq.s32.totalorder %s42, 0
      %p204 = por %p202, %p203
      %p205 = scmp.ne.s32.totalorder %s193, %s194
      %p206 = scmp.eq.s32.totalorder %s43, 3
      %p207 = por %p205, %p206
      %p209 = scmp.ne.s32.totalorder %s194, %s208
      %p210 = scmp.eq.s32.totalorder %s43, 0
      %p211 = por %p209, %p210
      %s213 = sadd.s32 %s212, 1
      %p216 = scmp.eq.s32.totalorder %s37, 3
      %p217 = scmp.ne.s32.totalorder %s212, %s214
      %p218 = scmp.eq.s32.totalorder %s37, 0
      %p219 = por %p217, %p218
      %p220 = scmp.ne.s32.totalorder %s212, %s214
      %p221 = scmp.eq.s32.totalorder %s42, 3
      %p222 = por %p220, %p221
      %p223 = scmp.ne.s32.totalorder %s214, %s215
      %p224 = scmp.eq.s32.totalorder %s42, 0
      %p225 = por %p223, %p224
      %p226 = scmp.ne.s32.totalorder %s214, %s215
      %p227 = scmp.eq.s32.totalorder %s43, 3
      %p228 = por %p226, %p227
      %p230 = scmp.ne.s32.totalorder %s215, %s229
      %p231 = scmp.eq.s32.totalorder %s43, 0
      %p232 = por %p230, %p231
      %s234 = sadd.s32 %s233, 1
      %p237 = scmp.eq.s32.totalorder %s37, 3
      %p238 = scmp.ne.s32.totalorder %s233, %s235
      %p239 = scmp.eq.s32.totalorder %s37, 0
      %p240 = por %p238, %p239
      %p241 = scmp.ne.s32.totalorder %s233, %s235
      %p242 = scmp.eq.s32.totalorder %s42, 3
      %p243 = por %p241, %p242
      %p244 = scmp.ne.s32.totalorder %s235, %s236
      %p245 = scmp.eq.s32.totalorder %s42, 0
      %p246 = por %p244, %p245
      %p247 = scmp.ne.s32.totalorder %s235, %s236
      %p248 = scmp.eq.s32.totalorder %s43, 3
      %p249 = por %p247, %p248
      %p251 = scmp.ne.s32.totalorder %s236, %s250
      %p252 = scmp.eq.s32.totalorder %s43, 0
      %p253 = por %p251, %p252
      %s255 = sadd.s32 %s254, 1
      %p258 = scmp.eq.s32.totalorder %s37, 3
      %p259 = scmp.ne.s32.totalorder %s254, %s256
      %p260 = scmp.eq.s32.totalorder %s37, 0
      %p261 = por %p259, %p260
      %p262 = scmp.ne.s32.totalorder %s254, %s256
      %p263 = scmp.eq.s32.totalorder %s42, 3
      %p264 = por %p262, %p263
      %p265 = scmp.ne.s32.totalorder %s256, %s257
      %p266 = scmp.eq.s32.totalorder %s42, 0
      %p267 = por %p265, %p266
      %p268 = scmp.ne.s32.totalorder %s256, %s257
      %p269 = scmp.eq.s32.totalorder %s43, 3
      %p270 = por %p268, %p269
      %p272 = scmp.ne.s32.totalorder %s257, %s271
      %p273 = scmp.eq.s32.totalorder %s43, 0
      %p274 = por %p272, %p273
      %s276 = sadd.s32 %s275, 1
      %p279 = scmp.eq.s32.totalorder %s37, 3
      %p280 = scmp.ne.s32.totalorder %s275, %s277
      %p281 = scmp.eq.s32.totalorder %s37, 0
      %p282 = por %p280, %p281
      %p283 = scmp.ne.s32.totalorder %s275, %s277
      %p284 = scmp.eq.s32.totalorder %s42, 3
      %p285 = por %p283, %p284
      %p286 = scmp.ne.s32.totalorder %s277, %s278
      %p287 = scmp.eq.s32.totalorder %s42, 0
      %p288 = por %p286, %p287
      %p289 = scmp.ne.s32.totalorder %s277, %s278
      %p290 = scmp.eq.s32.totalorder %s43, 3
      %p291 = por %p289, %p290
      %p293 = scmp.ne.s32.totalorder %s278, %s292
      %p294 = scmp.eq.s32.totalorder %s43, 0
      %p295 = por %p293, %p294
      %s297 = sadd.s32 %s296, 1
      %p300 = scmp.eq.s32.totalorder %s37, 3
      %p301 = scmp.ne.s32.totalorder %s296, %s298
      %p302 = scmp.eq.s32.totalorder %s37, 0
      %p303 = por %p301, %p302
      %p304 = scmp.ne.s32.totalorder %s296, %s298
      %p305 = scmp.eq.s32.totalorder %s42, 3
      %p306 = por %p304, %p305
      %p307 = scmp.ne.s32.totalorder %s298, %s299
      %p308 = scmp.eq.s32.totalorder %s42, 0
      %p309 = por %p307, %p308
      %p310 = scmp.ne.s32.totalorder %s298, %s299
      %p311 = scmp.eq.s32.totalorder %s43, 3
      %p312 = por %p310, %p311
      %p314 = scmp.ne.s32.totalorder %s299, %s313
      %p315 = scmp.eq.s32.totalorder %s43, 0
      %p316 = por %p314, %p315
      %s317 = ssub.s32 %s44, %s56
      %s318 = ssub.s32 %s45, %s52
      %s319 = sor.u32 %s317, %s318
      %p320 = scmp.eq.s32.totalorder %s319, 0
      %s322 = sadd.s32 %s321, 1
      %s323 = scalar_select %p320, %s321, %s322
      %p326 = pneg %p320
      %p327 = scmp.eq.s32.totalorder %s37, 3
      %p328 = por %p326, %p327
      %p329 = scmp.ne.s32.totalorder %s321, %s324
      %p330 = scmp.eq.s32.totalorder %s37, 0
      %p331 = por %p329, %p330
      %p332 = scmp.ne.s32.totalorder %s321, %s324
      %p333 = scmp.eq.s32.totalorder %s42, 3
      %p334 = por %p332, %p333
      %p335 = scmp.ne.s32.totalorder %s324, %s325
      %p336 = scmp.eq.s32.totalorder %s42, 0
      %p337 = por %p335, %p336
      %p338 = scmp.ne.s32.totalorder %s324, %s325
      %p339 = scmp.eq.s32.totalorder %s43, 3
      %p340 = por %p338, %p339
      %p342 = scmp.ne.s32.totalorder %s325, %s341
      %p343 = scmp.eq.s32.totalorder %s43, 0
      %p344 = por %p342, %p343
      %s345 = ssub.s32 %s44, %s56
      %s346 = ssub.s32 %s45, %s52
      %s347 = sor.u32 %s345, %s346
      %p348 = scmp.eq.s32.totalorder %s347, 0
      %s350 = sadd.s32 %s349, 1
      %s351 = scalar_select %p348, %s349, %s350
      %p354 = pneg %p348
      %p355 = scmp.eq.s32.totalorder %s37, 3
      %p356 = por %p354, %p355
      %p357 = scmp.ne.s32.totalorder %s349, %s352
      %p358 = scmp.eq.s32.totalorder %s37, 0
      %p359 = por %p357, %p358
      %p360 = scmp.ne.s32.totalorder %s349, %s352
      %p361 = scmp.eq.s32.totalorder %s42, 3
      %p362 = por %p360, %p361
      %p363 = scmp.ne.s32.totalorder %s352, %s353
      %p364 = scmp.eq.s32.totalorder %s42, 0
      %p365 = por %p363, %p364
      %p366 = scmp.ne.s32.totalorder %s352, %s353
      %p367 = scmp.eq.s32.totalorder %s43, 3
      %p368 = por %p366, %p367
      %p370 = scmp.ne.s32.totalorder %s353, %s369
      %p371 = scmp.eq.s32.totalorder %s43, 0
      %p372 = por %p370, %p371
      %p373 = scmp.le.s32.totalorder 1, %s37
      %p374 = scmp.lt.s32.totalorder %s37, 5
      %p375 = pnand %p373, %p374
      %p376 = pneg %p375
      // Predicated region
      $region9: #{tpu_custom_call.1} parent=5 // pred_check
        _
      $region10: #{tpu_custom_call.1} parent=5 // pred_check_branch
        %378 = sbr.rel (%p375) target = $region12
      $region11: #{tpu_custom_call.1} parent=5 // pred_region
        %s379 = ssub.s32 %s37, 1
        // Predicated region
        $region13: #{tpu_custom_call.1} parent=11 // pred_check
          %p380 = pneg %p204
        $region14: #{tpu_custom_call.1} parent=11 // pred_check_branch
          %382 = sbr.rel (%p380) target = $region16
        $region15: #{tpu_custom_call.1} parent=11 // pred_region
          %s384 = ssub.s32 16384, 16384
          %385 = vsyncadd [#allocation14], %s384
          %s386 = sshll.u32 [#allocation13], 4
          %s387 = int_to_ptr.vmem [resolvable:$true] %s386
          %392 = dma.hbm_to_vmem [thread:$0]  %s5, 16384, %s387, [#allocation14], 128, 128, 8
        $region16: #{tpu_custom_call.1} parent=11 // pred_fallthru
          _
        // Predicated region
        $region17: #{tpu_custom_call.1} parent=11 // pred_check
          %p393 = pneg %p225
        $region18: #{tpu_custom_call.1} parent=11 // pred_check_branch
          %395 = sbr.rel (%p393) target = $region20
        $region19: #{tpu_custom_call.1} parent=11 // pred_region
          %s397 = ssub.s32 64, 64
          %398 = vsyncadd [#allocation14], %s397
          %s399 = sshll.u32 [#allocation15], 4
          %s400 = int_to_ptr.vmem [resolvable:$true] %s399
          %405 = dma.hbm_to_vmem [thread:$0]  %s6, 64, %s400, [#allocation14], 16, 16, 1
        $region20: #{tpu_custom_call.1} parent=11 // pred_fallthru
          _
        // Predicated region
        $region21: #{tpu_custom_call.1} parent=11 // pred_check
          %p406 = pneg %p246
        $region22: #{tpu_custom_call.1} parent=11 // pred_check_branch
          %408 = sbr.rel (%p406) target = $region24
        $region23: #{tpu_custom_call.1} parent=11 // pred_region
          %s410 = ssub.s32 16384, 16384
          %411 = vsyncadd [#allocation17], %s410
          %s412 = sshll.u32 [#allocation16], 4
          %s413 = int_to_ptr.vmem [resolvable:$true] %s412
          %418 = dma.hbm_to_vmem [thread:$0]  %s7, 16384, %s413, [#allocation17], 128, 128, 8
        $region24: #{tpu_custom_call.1} parent=11 // pred_fallthru
          _
        // Predicated region
        $region25: #{tpu_custom_call.1} parent=11 // pred_check
          %p419 = pneg %p267
        $region26: #{tpu_custom_call.1} parent=11 // pred_check_branch
          %421 = sbr.rel (%p419) target = $region28
        $region27: #{tpu_custom_call.1} parent=11 // pred_region
          %s423 = ssub.s32 64, 64
          %424 = vsyncadd [#allocation17], %s423
          %s425 = sshll.u32 [#allocation18], 4
          %s426 = int_to_ptr.vmem [resolvable:$true] %s425
          %431 = dma.hbm_to_vmem [thread:$0]  %s8, 64, %s426, [#allocation17], 16, 16, 1
        $region28: #{tpu_custom_call.1} parent=11 // pred_fallthru
          _
        // Predicated region
        $region29: #{tpu_custom_call.1} parent=11 // pred_check
          %p432 = pneg %p288
        $region30: #{tpu_custom_call.1} parent=11 // pred_check_branch
          %434 = sbr.rel (%p432) target = $region32
        $region31: #{tpu_custom_call.1} parent=11 // pred_region
          %s436 = ssub.s32 16, 16
          %437 = vsyncadd [#allocation20], %s436
          %s439 = sshll.u32 [#allocation19], 4
          %s440 = int_to_ptr.vmem [resolvable:$true] %s439
          %442 = dma.hbm_to_vmem [thread:$0]  %s9, 16, %s440, [#allocation20]
        $region32: #{tpu_custom_call.1} parent=11 // pred_fallthru
          _
        // Predicated region
        $region33: #{tpu_custom_call.1} parent=11 // pred_check
          %p443 = pneg %p309
        $region34: #{tpu_custom_call.1} parent=11 // pred_check_branch
          %445 = sbr.rel (%p443) target = $region36
        $region35: #{tpu_custom_call.1} parent=11 // pred_region
          %s447 = ssub.s32 16, 16
          %448 = vsyncadd [#allocation20], %s447
          %s450 = sshll.u32 [#allocation21], 4
          %s451 = int_to_ptr.vmem [resolvable:$true] %s450
          %453 = dma.hbm_to_vmem [thread:$0]  %s10, 16, %s451, [#allocation20]
        $region36: #{tpu_custom_call.1} parent=11 // pred_fallthru
          _
      $region12: #{tpu_custom_call.1} parent=5 // pred_fallthru
        _
      %p454 = scmp.lt.s32.totalorder %s37, 4
      // Predicated region
      $region37: #{tpu_custom_call.1} parent=5 // pred_check
        %p455 = pneg %p454
      $region38: #{tpu_custom_call.1} parent=5 // pred_check_branch
        %457 = sbr.rel (%p455) target = $region40
      $region39: #{tpu_custom_call.1} parent=5 // pred_region
        // Predicated region
        $region41: #{tpu_custom_call.1} parent=39 // pred_check
          %p458 = pneg %p69
        $region42: #{tpu_custom_call.1} parent=39 // pred_check_branch
          %460 = sbr.rel (%p458) target = $region44
        $region43: #{tpu_custom_call.1} parent=39 // pred_region
          %s461 = sand.u32 %s59, 1
          %s462 = scalar_lea.sflag [#allocation5], %s461
          %s463 = sand.u32 %s59, 1
          %s464 = scalar_lea.vmem [#allocation4], %s463
          %s466 = ssub.s32 16, 16
          %467 = vsyncadd %s462, %s466
          %s468 = smul.addr %s44, 16
          %s469 = scalar_lea.hbm %s0, %s468
          %s471 = sshll.u32 %s464, 4
          %s472 = int_to_ptr.vmem [resolvable:$true] %s471
          %474 = dma.hbm_to_vmem [thread:$0]  %s469, 16, %s472, %s462
        $region44: #{tpu_custom_call.1} parent=39 // pred_fallthru
          _
        // Predicated region
        $region45: #{tpu_custom_call.1} parent=39 // pred_check
          %p475 = pneg %p97
        $region46: #{tpu_custom_call.1} parent=39 // pred_check_branch
          %477 = sbr.rel (%p475) target = $region48
        $region47: #{tpu_custom_call.1} parent=39 // pred_region
          %s478 = sand.u32 %s37, 1
          %s479 = scalar_lea.sflag [#allocation8], %s478
          %s480 = sand.u32 %s87, 1
          %s481 = smul.addr %s480, 16
          %s482 = scalar_lea.vmem [#allocation7], %s481
          %s484 = ssub.s32 256, 256
          %485 = vsyncadd %s479, %s484
          %s486 = smul.addr %s45, 2
          %s487 = smul.addr %s44, 4
          %s488 = sadd.s32 %s486, %s487
          %s489 = smul.addr %s488, 128
          %s490 = scalar_lea.hbm %s1, %s489
          %s492 = sshll.u32 %s482, 4
          %s493 = int_to_ptr.vmem [resolvable:$true] %s492
          %495 = dma.hbm_to_vmem [thread:$0]  %s490, 256, %s493, %s479
        $region48: #{tpu_custom_call.1} parent=39 // pred_fallthru
          _
        // Predicated region
        $region49: #{tpu_custom_call.1} parent=39 // pred_check
          %p496 = pneg %p123
        $region50: #{tpu_custom_call.1} parent=39 // pred_check_branch
          %498 = sbr.rel (%p496) target = $region52
        $region51: #{tpu_custom_call.1} parent=39 // pred_region
          %s499 = sand.u32 %s37, 1
          %s500 = scalar_lea.sflag [#allocation8], %s499
          %s501 = sand.u32 %s113, 1
          %s502 = smul.addr %s501, 32
          %s503 = scalar_lea.vmem [#allocation9], %s502
          %s505 = ssub.s32 512, 512
          %506 = vsyncadd %s500, %s505
          %s507 = smul.addr %s44, 4
          %s508 = smul.addr %s507, 128
          %s509 = scalar_lea.hbm %s2, %s508
          %s510 = sshll.u32 %s503, 4
          %s511 = int_to_ptr.vmem [resolvable:$true] %s510
          %516 = dma.hbm_to_vmem [thread:$0]  %s509, 512, %s511, %s500, 256, 256, 16
        $region52: #{tpu_custom_call.1} parent=39 // pred_fallthru
          _
        // Predicated region
        $region53: #{tpu_custom_call.1} parent=39 // pred_check
          %p517 = pneg %p151
        $region54: #{tpu_custom_call.1} parent=39 // pred_check_branch
          %519 = sbr.rel (%p517) target = $region56
        $region55: #{tpu_custom_call.1} parent=39 // pred_region
          %s520 = sand.u32 %s37, 1
          %s521 = scalar_lea.sflag [#allocation11], %s520
          %s522 = sand.u32 %s141, 1
          %s523 = smul.addr %s522, 8
          %s524 = scalar_lea.vmem [#allocation10], %s523
          %s526 = ssub.s32 128, 128
          %527 = vsyncadd %s521, %s526
          %s528 = smul.addr %s45, 2
          %s529 = smul.addr %s44, 4
          %s530 = sadd.s32 %s528, %s529
          %s531 = smul.addr %s530, 128
          %s532 = scalar_lea.hbm %s3, %s531
          %s534 = sshll.u32 %s524, 4
          %s535 = int_to_ptr.vmem [resolvable:$true] %s534
          %537 = dma.hbm_to_vmem [thread:$0]  %s532, 128, %s535, %s521
        $region56: #{tpu_custom_call.1} parent=39 // pred_fallthru
          _
        // Predicated region
        $region57: #{tpu_custom_call.1} parent=39 // pred_check
          %p538 = pneg %p177
        $region58: #{tpu_custom_call.1} parent=39 // pred_check_branch
          %540 = sbr.rel (%p538) target = $region60
        $region59: #{tpu_custom_call.1} parent=39 // pred_region
          %s541 = sand.u32 %s37, 1
          %s542 = scalar_lea.sflag [#allocation11], %s541
          %s543 = sand.u32 %s167, 1
          %s544 = smul.addr %s543, 16
          %s545 = scalar_lea.vmem [#allocation12], %s544
          %s547 = ssub.s32 256, 256
          %548 = vsyncadd %s542, %s547
          %s549 = smul.addr %s44, 4
          %s550 = sadd.s32 1, %s549
          %s551 = smul.addr %s550, 128
          %s552 = scalar_lea.hbm %s4, %s551
          %s553 = sshll.u32 %s545, 4
          %s554 = int_to_ptr.vmem [resolvable:$true] %s553
          %559 = dma.hbm_to_vmem [thread:$0]  %s552, 256, %s554, %s542, 256, 128, 8
        $region60: #{tpu_custom_call.1} parent=39 // pred_fallthru
          _
      $region40: #{tpu_custom_call.1} parent=5 // pred_fallthru
        _
      %p560 = scmp.le.s32.totalorder 1, %s37
      %p561 = scmp.lt.s32.totalorder %s37, 5
      %p562 = pnand %p560, %p561
      %p563 = pneg %p562
      // Predicated region
      $region61: #{tpu_custom_call.1} parent=5 // pred_check
        _
      $region62: #{tpu_custom_call.1} parent=5 // pred_check_branch
        %565 = sbr.rel (%p562) target = $region64
      $region63: #{tpu_custom_call.1} parent=5 // pred_region
        %s566 = ssub.s32 %s37, 1
        %s567 = sand.u32 %s62, 1
        %s568 = scalar_lea.sflag [#allocation5], %s567
        %s569 = sand.u32 %s62, 1
        %s570 = scalar_lea.vmem [#allocation4], %s569
        // Predicated region
        $region65: #{tpu_custom_call.1} parent=63 // pred_check
          %p571 = pneg %p75
        $region66: #{tpu_custom_call.1} parent=63 // pred_check_branch
          %573 = sbr.rel (%p571) target = $region68
        $region67: #{tpu_custom_call.1} parent=63 // pred_region
          %574 = dma.done %s568, 16
        $region68: #{tpu_custom_call.1} parent=63 // pred_fallthru
          _
        %s575 = sand.u32 %s42, 1
        %s576 = scalar_lea.sflag [#allocation8], %s575
        %s577 = sand.u32 %s90, 1
        %s578 = smul.addr %s577, 16
        %s579 = scalar_lea.vmem [#allocation7], %s578
        // Predicated region
        $region69: #{tpu_custom_call.1} parent=63 // pred_check
          %p580 = pneg %p103
        $region70: #{tpu_custom_call.1} parent=63 // pred_check_branch
          %582 = sbr.rel (%p580) target = $region72
        $region71: #{tpu_custom_call.1} parent=63 // pred_region
          %583 = dma.done %s576, 256
        $region72: #{tpu_custom_call.1} parent=63 // pred_fallthru
          _
        %s584 = sand.u32 %s42, 1
        %s585 = scalar_lea.sflag [#allocation8], %s584
        %s586 = sand.u32 %s116, 1
        %s587 = smul.addr %s586, 32
        %s588 = scalar_lea.vmem [#allocation9], %s587
        // Predicated region
        $region73: #{tpu_custom_call.1} parent=63 // pred_check
          %p589 = pneg %p129
        $region74: #{tpu_custom_call.1} parent=63 // pred_check_branch
          %591 = sbr.rel (%p589) target = $region76
        $region75: #{tpu_custom_call.1} parent=63 // pred_region
          %592 = dma.done %s585, 512
        $region76: #{tpu_custom_call.1} parent=63 // pred_fallthru
          _
        %s593 = sand.u32 %s42, 1
        %s594 = scalar_lea.sflag [#allocation11], %s593
        %s595 = sand.u32 %s144, 1
        %s596 = smul.addr %s595, 8
        %s597 = scalar_lea.vmem [#allocation10], %s596
        // Predicated region
        $region77: #{tpu_custom_call.1} parent=63 // pred_check
          %p598 = pneg %p157
        $region78: #{tpu_custom_call.1} parent=63 // pred_check_branch
          %600 = sbr.rel (%p598) target = $region80
        $region79: #{tpu_custom_call.1} parent=63 // pred_region
          %601 = dma.done %s594, 128
        $region80: #{tpu_custom_call.1} parent=63 // pred_fallthru
          _
        %s602 = sand.u32 %s42, 1
        %s603 = scalar_lea.sflag [#allocation11], %s602
        %s604 = sand.u32 %s170, 1
        %s605 = smul.addr %s604, 16
        %s606 = scalar_lea.vmem [#allocation12], %s605
        // Predicated region
        $region81: #{tpu_custom_call.1} parent=63 // pred_check
          %p607 = pneg %p183
        $region82: #{tpu_custom_call.1} parent=63 // pred_check_branch
          %609 = sbr.rel (%p607) target = $region84
        $region83: #{tpu_custom_call.1} parent=63 // pred_region
          %610 = dma.done %s603, 256
        $region84: #{tpu_custom_call.1} parent=63 // pred_fallthru
          _
        // Predicated region
        $region85: #{tpu_custom_call.1} parent=63 // pred_check
          %p611 = pneg %p204
        $region86: #{tpu_custom_call.1} parent=63 // pred_check_branch
          %613 = sbr.rel (%p611) target = $region88
        $region87: #{tpu_custom_call.1} parent=63 // pred_region
          %614 = dma.done [#allocation14], 16384
        $region88: #{tpu_custom_call.1} parent=63 // pred_fallthru
          _
        // Predicated region
        $region89: #{tpu_custom_call.1} parent=63 // pred_check
          %p615 = pneg %p225
        $region90: #{tpu_custom_call.1} parent=63 // pred_check_branch
          %617 = sbr.rel (%p615) target = $region92
        $region91: #{tpu_custom_call.1} parent=63 // pred_region
          %618 = dma.done [#allocation14], 64
        $region92: #{tpu_custom_call.1} parent=63 // pred_fallthru
          _
        // Predicated region
        $region93: #{tpu_custom_call.1} parent=63 // pred_check
          %p619 = pneg %p246
        $region94: #{tpu_custom_call.1} parent=63 // pred_check_branch
          %621 = sbr.rel (%p619) target = $region96
        $region95: #{tpu_custom_call.1} parent=63 // pred_region
          %622 = dma.done [#allocation17], 16384
        $region96: #{tpu_custom_call.1} parent=63 // pred_fallthru
          _
        // Predicated region
        $region97: #{tpu_custom_call.1} parent=63 // pred_check
          %p623 = pneg %p267
        $region98: #{tpu_custom_call.1} parent=63 // pred_check_branch
          %625 = sbr.rel (%p623) target = $region100
        $region99: #{tpu_custom_call.1} parent=63 // pred_region
          %626 = dma.done [#allocation17], 64
        $region100: #{tpu_custom_call.1} parent=63 // pred_fallthru
          _
        // Predicated region
        $region101: #{tpu_custom_call.1} parent=63 // pred_check
          %p627 = pneg %p288
        $region102: #{tpu_custom_call.1} parent=63 // pred_check_branch
          %629 = sbr.rel (%p627) target = $region104
        $region103: #{tpu_custom_call.1} parent=63 // pred_region
          %630 = dma.done [#allocation20], 16
        $region104: #{tpu_custom_call.1} parent=63 // pred_fallthru
          _
        // Predicated region
        $region105: #{tpu_custom_call.1} parent=63 // pred_check
          %p631 = pneg %p309
        $region106: #{tpu_custom_call.1} parent=63 // pred_check_branch
          %633 = sbr.rel (%p631) target = $region108
        $region107: #{tpu_custom_call.1} parent=63 // pred_region
          %634 = dma.done [#allocation20], 16
        $region108: #{tpu_custom_call.1} parent=63 // pred_fallthru
          _
        %s635 = sand.u32 %s62, 1
        %s636 = scalar_lea.sflag [#allocation5], %s635
        %s637 = sand.u32 %s62, 1
        %s638 = scalar_lea.vmem [#allocation4], %s637
        %p639 = pneg %p75
        %p640 = pneg %p72
        %s641 = sand.u32 %s42, 1
        %s642 = scalar_lea.sflag [#allocation8], %s641
        %s643 = sand.u32 %s90, 1
        %s644 = smul.addr %s643, 16
        %s645 = scalar_lea.vmem [#allocation7], %s644
        %p646 = pneg %p103
        %p647 = pneg %p100
        %s648 = sand.u32 %s42, 1
        %s649 = scalar_lea.sflag [#allocation8], %s648
        %s650 = sand.u32 %s116, 1
        %s651 = smul.addr %s650, 32
        %s652 = scalar_lea.vmem [#allocation9], %s651
        %p653 = pneg %p129
        %p654 = pneg %p126
        %s655 = sand.u32 %s42, 1
        %s656 = scalar_lea.sflag [#allocation11], %s655
        %s657 = sand.u32 %s144, 1
        %s658 = smul.addr %s657, 8
        %s659 = scalar_lea.vmem [#allocation10], %s658
        %p660 = pneg %p157
        %p661 = pneg %p154
        %s662 = sand.u32 %s42, 1
        %s663 = scalar_lea.sflag [#allocation11], %s662
        %s664 = sand.u32 %s170, 1
        %s665 = smul.addr %s664, 16
        %s666 = scalar_lea.vmem [#allocation12], %s665
        %p667 = pneg %p183
        %p668 = pneg %p180
        %p669 = pneg %p204
        %p670 = pneg %p201
        %p671 = pneg %p225
        %p672 = pneg %p222
        %p673 = pneg %p246
        %p674 = pneg %p243
        %p675 = pneg %p267
        %p676 = pneg %p264
        %p677 = pneg %p288
        %p678 = pneg %p285
        %p679 = pneg %p309
        %p680 = pneg %p306
        %p681 = pneg %p337
        %p682 = pneg %p334
        %s683 = sand.u32 %s324, 1
        %s684 = scalar_lea.sflag [#allocation6], %s683
        %s685 = sand.u32 %s324, 1
        %s686 = smul.addr %s685, 16
        %s687 = scalar_lea.vmem [#allocation22], %s686
        %p688 = pneg %p365
        %p689 = pneg %p362
        %s690 = sand.u32 %s352, 1
        %s691 = scalar_lea.sflag [#allocation24], %s690
        %s692 = sand.u32 %s352, 1
        %s693 = smul.addr %s692, 8
        %s694 = scalar_lea.vmem [#allocation23], %s693
        %p695 = scmp.eq.s32.totalorder %s47, 0
        // Predicated region
        $region109: #{tpu_custom_call.1} parent=63 // pred_check
          %p696 = pneg %p695
        $region110: #{tpu_custom_call.1} parent=63 // pred_check_branch
          %698 = sbr.rel (%p696) target = $region112
        $region111: #{tpu_custom_call.1} parent=63 // pred_region
          %v699 = vld [vmem:[%s588] sm:$0xff]
          %v700 = vld [vmem:[%s588 + $0x8] sm:$0xff]
          %v701 = vld [vmem:[%s588 + $0x10] sm:$0xff]
          %v702 = vld [vmem:[%s588 + $0x18] sm:$0xff]
          %v703 = vld [vmem:[#allocation16] sm:$0xff]
          %v704 = vld [vmem:[#allocation16 + $0x8] sm:$0xff]
          %v705 = vld [vmem:[#allocation16 + $0x10] sm:$0xff]
          %v706 = vld [vmem:[#allocation16 + $0x18] sm:$0xff]
          %v707 = vld [vmem:[#allocation16 + $0x20] sm:$0xff]
          %v708 = vld [vmem:[#allocation16 + $0x28] sm:$0xff]
          %v709 = vld [vmem:[#allocation16 + $0x30] sm:$0xff]
          %v710 = vld [vmem:[#allocation16 + $0x38] sm:$0xff]
          %v711 = vld [vmem:[#allocation16 + $0x40] sm:$0xff]
          %v712 = vld [vmem:[#allocation16 + $0x48] sm:$0xff]
          %v713 = vld [vmem:[#allocation16 + $0x50] sm:$0xff]
          %v714 = vld [vmem:[#allocation16 + $0x58] sm:$0xff]
          %v715 = vld [vmem:[#allocation16 + $0x60] sm:$0xff]
          %v716 = vld [vmem:[#allocation16 + $0x68] sm:$0xff]
          %v717 = vld [vmem:[#allocation16 + $0x70] sm:$0xff]
          %v718 = vld [vmem:[#allocation16 + $0x78] sm:$0xff]
          %v719 = vld [vmem:[#allocation16 + $0x80] sm:$0xff]
          %v720 = vld [vmem:[#allocation16 + $0x88] sm:$0xff]
          %v721 = vld [vmem:[#allocation16 + $0x90] sm:$0xff]
          %v722 = vld [vmem:[#allocation16 + $0x98] sm:$0xff]
          %v723 = vld [vmem:[#allocation16 + $0xa0] sm:$0xff]
          %v724 = vld [vmem:[#allocation16 + $0xa8] sm:$0xff]
          %v725 = vld [vmem:[#allocation16 + $0xb0] sm:$0xff]
          %v726 = vld [vmem:[#allocation16 + $0xb8] sm:$0xff]
          %v727 = vld [vmem:[#allocation16 + $0xc0] sm:$0xff]
          %v728 = vld [vmem:[#allocation16 + $0xc8] sm:$0xff]
          %v729 = vld [vmem:[#allocation16 + $0xd0] sm:$0xff]
          %v730 = vld [vmem:[#allocation16 + $0xd8] sm:$0xff]
          %v731 = vld [vmem:[#allocation16 + $0xe0] sm:$0xff]
          %v732 = vld [vmem:[#allocation16 + $0xe8] sm:$0xff]
          %v733 = vld [vmem:[#allocation16 + $0xf0] sm:$0xff]
          %v734 = vld [vmem:[#allocation16 + $0xf8] sm:$0xff]
          %v735 = vld [vmem:[#allocation18] sm:$0x1]
          %v737 = vlaneseq
          %v738 = vshrl.u32 %v737, 7
          %v739 = vsub.s32 0, %v738
          %v740 = vrot.slane %v735, %v739
          %742 = vmatprep.subr.mxu0 0.0
          %743 = vmatpush1.msra.mxu0 %v703
          %744 = vmatprep.subr.mxu0 0.0
          %745 = vmatpush1.msra.mxu0 %v704
          %746 = vmatprep.subr.mxu0 0.0
          %747 = vmatpush1.msra.mxu0 %v705
          %748 = vmatprep.subr.mxu0 0.0
          %749 = vmatpush1.msra.mxu0 %v706
          %750 = vmatprep.subr.mxu0 0.0
          %751 = vmatpush1.msra.mxu0 %v707
          %752 = vmatprep.subr.mxu0 0.0
          %753 = vmatpush1.msra.mxu0 %v708
          %754 = vmatprep.subr.mxu0 0.0
          %755 = vmatpush1.msra.mxu0 %v709
          %756 = vmatprep.subr.mxu0 0.0
          %757 = vmatpush1.msra.mxu0 %v710
          %758 = vmatprep.subr.mxu0 0.0
          %759 = vmatpush1.msra.mxu0 %v711
          %760 = vmatprep.subr.mxu0 0.0
          %761 = vmatpush1.msra.mxu0 %v712
          %762 = vmatprep.subr.mxu0 0.0
          %763 = vmatpush1.msra.mxu0 %v713
          %764 = vmatprep.subr.mxu0 0.0
          %765 = vmatpush1.msra.mxu0 %v714
          %766 = vmatprep.subr.mxu0 0.0
          %767 = vmatpush1.msra.mxu0 %v715
          %768 = vmatprep.subr.mxu0 0.0
          %769 = vmatpush1.msra.mxu0 %v716
          %770 = vmatprep.subr.mxu0 0.0
          %771 = vmatpush1.msra.mxu0 %v717
          %772 = vmatprep.subr.mxu0 0.0
          %773 = vmatpush1.msra.mxu0 %v718
          %774 = vmatprep.subr.mxu0 0.0
          %775 = vmatpush1.msra.mxu0 %v719
          %776 = vmatprep.subr.mxu0 0.0
          %777 = vmatpush1.msra.mxu0 %v720
          %778 = vmatprep.subr.mxu0 0.0
          %779 = vmatpush1.msra.mxu0 %v721
          %780 = vmatprep.subr.mxu0 0.0
          %781 = vmatpush1.msra.mxu0 %v722
          %782 = vmatprep.subr.mxu0 0.0
          %783 = vmatpush1.msra.mxu0 %v723
          %784 = vmatprep.subr.mxu0 0.0
          %785 = vmatpush1.msra.mxu0 %v724
          %786 = vmatprep.subr.mxu0 0.0
          %787 = vmatpush1.msra.mxu0 %v725
          %788 = vmatprep.subr.mxu0 0.0
          %789 = vmatpush1.msra.mxu0 %v726
          %790 = vmatprep.subr.mxu0 0.0
          %791 = vmatpush1.msra.mxu0 %v727
          %792 = vmatprep.subr.mxu0 0.0
          %793 = vmatpush1.msra.mxu0 %v728
          %794 = vmatprep.subr.mxu0 0.0
          %795 = vmatpush1.msra.mxu0 %v729
          %796 = vmatprep.subr.mxu0 0.0
          %797 = vmatpush1.msra.mxu0 %v730
          %798 = vmatprep.subr.mxu0 0.0
          %799 = vmatpush1.msra.mxu0 %v731
          %800 = vmatprep.subr.mxu0 0.0
          %801 = vmatpush1.msra.mxu0 %v732
          %802 = vmatprep.subr.mxu0 0.0
          %803 = vmatpush1.msra.mxu0 %v733
          %804 = vmatprep.subr.mxu0 0.0
          %805 = vmatpush1.msra.mxu0 %v734
          %806 = vmatprep.mubr.f32.mxu0 %v700
          %807 = vmatmul.mubr.f32.gmra.mrb[0].mxu0 %v699
          %v808 = vpop.f32.mrb[0].mxu0
          %v809 = vadd.f32 %v740, %v808
          %v810 = vpop.f32.mrb[0].mxu0
          %811 = vmatprep.mubr.f32.mxu0 %v702
          %812 = vmatmul.mubr.f32.gmra.mrb[0].mxu0 %v701
          %v813 = vpop.f32.mrb[0].mxu0
          %v814 = vadd.f32 %v740, %v813
          %v815 = vpop.f32.mrb[0].mxu0
          %816 = vdwg.mxu0
          %vm817 = vcmask 523264
          %818 = vst.msk [vmem:[#allocation2] sm:$0xff] %vm817, %v809
          %819 = vst.msk [vmem:[#allocation2 + $0x8] sm:$0xff] %vm817, %v814
          %s820 = scalar_lea.vmem [#allocation16], 256
          %v821 = vld [vmem:[%s820] sm:$0xff]
          %v822 = vld [vmem:[%s820 + $0x8] sm:$0xff]
          %v823 = vld [vmem:[%s820 + $0x10] sm:$0xff]
          %v824 = vld [vmem:[%s820 + $0x18] sm:$0xff]
          %v825 = vld [vmem:[%s820 + $0x20] sm:$0xff]
          %v826 = vld [vmem:[%s820 + $0x28] sm:$0xff]
          %v827 = vld [vmem:[%s820 + $0x30] sm:$0xff]
          %v828 = vld [vmem:[%s820 + $0x38] sm:$0xff]
          %v829 = vld [vmem:[%s820 + $0x40] sm:$0xff]
          %v830 = vld [vmem:[%s820 + $0x48] sm:$0xff]
          %v831 = vld [vmem:[%s820 + $0x50] sm:$0xff]
          %v832 = vld [vmem:[%s820 + $0x58] sm:$0xff]
          %v833 = vld [vmem:[%s820 + $0x60] sm:$0xff]
          %v834 = vld [vmem:[%s820 + $0x68] sm:$0xff]
          %v835 = vld [vmem:[%s820 + $0x70] sm:$0xff]
          %v836 = vld [vmem:[%s820 + $0x78] sm:$0xff]
          %v837 = vld [vmem:[%s820 + $0x80] sm:$0xff]
          %v838 = vld [vmem:[%s820 + $0x88] sm:$0xff]
          %v839 = vld [vmem:[%s820 + $0x90] sm:$0xff]
          %v840 = vld [vmem:[%s820 + $0x98] sm:$0xff]
          %v841 = vld [vmem:[%s820 + $0xa0] sm:$0xff]
          %v842 = vld [vmem:[%s820 + $0xa8] sm:$0xff]
          %v843 = vld [vmem:[%s820 + $0xb0] sm:$0xff]
          %v844 = vld [vmem:[%s820 + $0xb8] sm:$0xff]
          %v845 = vld [vmem:[%s820 + $0xc0] sm:$0xff]
          %v846 = vld [vmem:[%s820 + $0xc8] sm:$0xff]
          %v847 = vld [vmem:[%s820 + $0xd0] sm:$0xff]
          %v848 = vld [vmem:[%s820 + $0xd8] sm:$0xff]
          %v849 = vld [vmem:[%s820 + $0xe0] sm:$0xff]
          %v850 = vld [vmem:[%s820 + $0xe8] sm:$0xff]
          %v851 = vld [vmem:[%s820 + $0xf0] sm:$0xff]
          %v852 = vld [vmem:[%s820 + $0xf8] sm:$0xff]
          %s853 = scalar_lea.vmem [#allocation18], 1
          %v854 = vld [vmem:[%s853] sm:$0x1]
          %v856 = vlaneseq
          %v857 = vshrl.u32 %v856, 7
          %v858 = vsub.s32 0, %v857
          %v859 = vrot.slane %v854, %v858
          %861 = vmatprep.subr.mxu0 0.0
          %862 = vmatpush1.msra.mxu0 %v821
          %863 = vmatprep.subr.mxu0 0.0
          %864 = vmatpush1.msra.mxu0 %v822
          %865 = vmatprep.subr.mxu0 0.0
          %866 = vmatpush1.msra.mxu0 %v823
          %867 = vmatprep.subr.mxu0 0.0
          %868 = vmatpush1.msra.mxu0 %v824
          %869 = vmatprep.subr.mxu0 0.0
          %870 = vmatpush1.msra.mxu0 %v825
          %871 = vmatprep.subr.mxu0 0.0
          %872 = vmatpush1.msra.mxu0 %v826
          %873 = vmatprep.subr.mxu0 0.0
          %874 = vmatpush1.msra.mxu0 %v827
          %875 = vmatprep.subr.mxu0 0.0
          %876 = vmatpush1.msra.mxu0 %v828
          %877 = vmatprep.subr.mxu0 0.0
          %878 = vmatpush1.msra.mxu0 %v829
          %879 = vmatprep.subr.mxu0 0.0
          %880 = vmatpush1.msra.mxu0 %v830
          %881 = vmatprep.subr.mxu0 0.0
          %882 = vmatpush1.msra.mxu0 %v831
          %883 = vmatprep.subr.mxu0 0.0
          %884 = vmatpush1.msra.mxu0 %v832
          %885 = vmatprep.subr.mxu0 0.0
          %886 = vmatpush1.msra.mxu0 %v833
          %887 = vmatprep.subr.mxu0 0.0
          %888 = vmatpush1.msra.mxu0 %v834
          %889 = vmatprep.subr.mxu0 0.0
          %890 = vmatpush1.msra.mxu0 %v835
          %891 = vmatprep.subr.mxu0 0.0
          %892 = vmatpush1.msra.mxu0 %v836
          %893 = vmatprep.subr.mxu0 0.0
          %894 = vmatpush1.msra.mxu0 %v837
          %895 = vmatprep.subr.mxu0 0.0
          %896 = vmatpush1.msra.mxu0 %v838
          %897 = vmatprep.subr.mxu0 0.0
          %898 = vmatpush1.msra.mxu0 %v839
          %899 = vmatprep.subr.mxu0 0.0
          %900 = vmatpush1.msra.mxu0 %v840
          %901 = vmatprep.subr.mxu0 0.0
          %902 = vmatpush1.msra.mxu0 %v841
          %903 = vmatprep.subr.mxu0 0.0
          %904 = vmatpush1.msra.mxu0 %v842
          %905 = vmatprep.subr.mxu0 0.0
          %906 = vmatpush1.msra.mxu0 %v843
          %907 = vmatprep.subr.mxu0 0.0
          %908 = vmatpush1.msra.mxu0 %v844
          %909 = vmatprep.subr.mxu0 0.0
          %910 = vmatpush1.msra.mxu0 %v845
          %911 = vmatprep.subr.mxu0 0.0
          %912 = vmatpush1.msra.mxu0 %v846
          %913 = vmatprep.subr.mxu0 0.0
          %914 = vmatpush1.msra.mxu0 %v847
          %915 = vmatprep.subr.mxu0 0.0
          %916 = vmatpush1.msra.mxu0 %v848
          %917 = vmatprep.subr.mxu0 0.0
          %918 = vmatpush1.msra.mxu0 %v849
          %919 = vmatprep.subr.mxu0 0.0
          %920 = vmatpush1.msra.mxu0 %v850
          %921 = vmatprep.subr.mxu0 0.0
          %922 = vmatpush1.msra.mxu0 %v851
          %923 = vmatprep.subr.mxu0 0.0
          %924 = vmatpush1.msra.mxu0 %v852
          %925 = vmatprep.mubr.f32.mxu0 %v700
          %926 = vmatmul.mubr.f32.gmra.mrb[0].mxu0 %v699
          %v927 = vpop.f32.mrb[0].mxu0
          %v928 = vadd.f32 %v859, %v927
          %v929 = vpop.f32.mrb[0].mxu0
          %930 = vmatprep.mubr.f32.mxu0 %v702
          %931 = vmatmul.mubr.f32.gmra.mrb[0].mxu0 %v701
          %v932 = vpop.f32.mrb[0].mxu0
          %v933 = vadd.f32 %v859, %v932
          %v934 = vpop.f32.mrb[0].mxu0
          %935 = vdwg.mxu0
          %s936 = scalar_lea.vmem [#allocation2], 16
          %937 = vst.msk [vmem:[%s936] sm:$0xff] %vm817, %v928
          %938 = vst.msk [vmem:[%s936 + $0x8] sm:$0xff] %vm817, %v933
          %s939 = scalar_lea.vmem [#allocation16], 512
          %v940 = vld [vmem:[%s939] sm:$0xff]
          %v941 = vld [vmem:[%s939 + $0x8] sm:$0xff]
          %v942 = vld [vmem:[%s939 + $0x10] sm:$0xff]
          %v943 = vld [vmem:[%s939 + $0x18] sm:$0xff]
          %v944 = vld [vmem:[%s939 + $0x20] sm:$0xff]
          %v945 = vld [vmem:[%s939 + $0x28] sm:$0xff]
          %v946 = vld [vmem:[%s939 + $0x30] sm:$0xff]
          %v947 = vld [vmem:[%s939 + $0x38] sm:$0xff]
          %v948 = vld [vmem:[%s939 + $0x40] sm:$0xff]
          %v949 = vld [vmem:[%s939 + $0x48] sm:$0xff]
          %v950 = vld [vmem:[%s939 + $0x50] sm:$0xff]
          %v951 = vld [vmem:[%s939 + $0x58] sm:$0xff]
          %v952 = vld [vmem:[%s939 + $0x60] sm:$0xff]
          %v953 = vld [vmem:[%s939 + $0x68] sm:$0xff]
          %v954 = vld [vmem:[%s939 + $0x70] sm:$0xff]
          %v955 = vld [vmem:[%s939 + $0x78] sm:$0xff]
          %v956 = vld [vmem:[%s939 + $0x80] sm:$0xff]
          %v957 = vld [vmem:[%s939 + $0x88] sm:$0xff]
          %v958 = vld [vmem:[%s939 + $0x90] sm:$0xff]
          %v959 = vld [vmem:[%s939 + $0x98] sm:$0xff]
          %v960 = vld [vmem:[%s939 + $0xa0] sm:$0xff]
          %v961 = vld [vmem:[%s939 + $0xa8] sm:$0xff]
          %v962 = vld [vmem:[%s939 + $0xb0] sm:$0xff]
          %v963 = vld [vmem:[%s939 + $0xb8] sm:$0xff]
          %v964 = vld [vmem:[%s939 + $0xc0] sm:$0xff]
          %v965 = vld [vmem:[%s939 + $0xc8] sm:$0xff]
          %v966 = vld [vmem:[%s939 + $0xd0] sm:$0xff]
          %v967 = vld [vmem:[%s939 + $0xd8] sm:$0xff]
          %v968 = vld [vmem:[%s939 + $0xe0] sm:$0xff]
          %v969 = vld [vmem:[%s939 + $0xe8] sm:$0xff]
          %v970 = vld [vmem:[%s939 + $0xf0] sm:$0xff]
          %v971 = vld [vmem:[%s939 + $0xf8] sm:$0xff]
          %s972 = scalar_lea.vmem [#allocation18], 2
          %v973 = vld [vmem:[%s972] sm:$0x1]
          %v975 = vlaneseq
          %v976 = vshrl.u32 %v975, 7
          %v977 = vsub.s32 0, %v976
          %v978 = vrot.slane %v973, %v977
          %980 = vmatprep.subr.mxu0 0.0
          %981 = vmatpush1.msra.mxu0 %v940
          %982 = vmatprep.subr.mxu0 0.0
          %983 = vmatpush1.msra.mxu0 %v941
          %984 = vmatprep.subr.mxu0 0.0
          %985 = vmatpush1.msra.mxu0 %v942
          %986 = vmatprep.subr.mxu0 0.0
          %987 = vmatpush1.msra.mxu0 %v943
          %988 = vmatprep.subr.mxu0 0.0
          %989 = vmatpush1.msra.mxu0 %v944
          %990 = vmatprep.subr.mxu0 0.0
          %991 = vmatpush1.msra.mxu0 %v945
          %992 = vmatprep.subr.mxu0 0.0
          %993 = vmatpush1.msra.mxu0 %v946
          %994 = vmatprep.subr.mxu0 0.0
          %995 = vmatpush1.msra.mxu0 %v947
          %996 = vmatprep.subr.mxu0 0.0
          %997 = vmatpush1.msra.mxu0 %v948
          %998 = vmatprep.subr.mxu0 0.0
          %999 = vmatpush1.msra.mxu0 %v949
          %1000 = vmatprep.subr.mxu0 0.0
          %1001 = vmatpush1.msra.mxu0 %v950
          %1002 = vmatprep.subr.mxu0 0.0
          %1003 = vmatpush1.msra.mxu0 %v951
          %1004 = vmatprep.subr.mxu0 0.0
          %1005 = vmatpush1.msra.mxu0 %v952
          %1006 = vmatprep.subr.mxu0 0.0
          %1007 = vmatpush1.msra.mxu0 %v953
          %1008 = vmatprep.subr.mxu0 0.0
          %1009 = vmatpush1.msra.mxu0 %v954
          %1010 = vmatprep.subr.mxu0 0.0
          %1011 = vmatpush1.msra.mxu0 %v955
          %1012 = vmatprep.subr.mxu0 0.0
          %1013 = vmatpush1.msra.mxu0 %v956
          %1014 = vmatprep.subr.mxu0 0.0
          %1015 = vmatpush1.msra.mxu0 %v957
          %1016 = vmatprep.subr.mxu0 0.0
          %1017 = vmatpush1.msra.mxu0 %v958
          %1018 = vmatprep.subr.mxu0 0.0
          %1019 = vmatpush1.msra.mxu0 %v959
          %1020 = vmatprep.subr.mxu0 0.0
          %1021 = vmatpush1.msra.mxu0 %v960
          %1022 = vmatprep.subr.mxu0 0.0
          %1023 = vmatpush1.msra.mxu0 %v961
          %1024 = vmatprep.subr.mxu0 0.0
          %1025 = vmatpush1.msra.mxu0 %v962
          %1026 = vmatprep.subr.mxu0 0.0
          %1027 = vmatpush1.msra.mxu0 %v963
          %1028 = vmatprep.subr.mxu0 0.0
          %1029 = vmatpush1.msra.mxu0 %v964
          %1030 = vmatprep.subr.mxu0 0.0
          %1031 = vmatpush1.msra.mxu0 %v965
          %1032 = vmatprep.subr.mxu0 0.0
          %1033 = vmatpush1.msra.mxu0 %v966
          %1034 = vmatprep.subr.mxu0 0.0
          %1035 = vmatpush1.msra.mxu0 %v967
          %1036 = vmatprep.subr.mxu0 0.0
          %1037 = vmatpush1.msra.mxu0 %v968
          %1038 = vmatprep.subr.mxu0 0.0
          %1039 = vmatpush1.msra.mxu0 %v969
          %1040 = vmatprep.subr.mxu0 0.0
          %1041 = vmatpush1.msra.mxu0 %v970
          %1042 = vmatprep.subr.mxu0 0.0
          %1043 = vmatpush1.msra.mxu0 %v971
          %1044 = vmatprep.mubr.f32.mxu0 %v700
          %1045 = vmatmul.mubr.f32.gmra.mrb[0].mxu0 %v699
          %v1046 = vpop.f32.mrb[0].mxu0
          %v1047 = vadd.f32 %v978, %v1046
          %v1048 = vpop.f32.mrb[0].mxu0
          %1049 = vmatprep.mubr.f32.mxu0 %v702
          %1050 = vmatmul.mubr.f32.gmra.mrb[0].mxu0 %v701
          %v1051 = vpop.f32.mrb[0].mxu0
          %v1052 = vadd.f32 %v978, %v1051
          %v1053 = vpop.f32.mrb[0].mxu0
          %1054 = vdwg.mxu0
          %s1055 = scalar_lea.vmem [#allocation2], 32
          %1056 = vst.msk [vmem:[%s1055] sm:$0xff] %vm817, %v1047
          %1057 = vst.msk [vmem:[%s1055 + $0x8] sm:$0xff] %vm817, %v1052
          %s1058 = scalar_lea.vmem [#allocation16], 768
          %v1059 = vld [vmem:[%s1058] sm:$0xff]
          %v1060 = vld [vmem:[%s1058 + $0x8] sm:$0xff]
          %v1061 = vld [vmem:[%s1058 + $0x10] sm:$0xff]
          %v1062 = vld [vmem:[%s1058 + $0x18] sm:$0xff]
          %v1063 = vld [vmem:[%s1058 + $0x20] sm:$0xff]
          %v1064 = vld [vmem:[%s1058 + $0x28] sm:$0xff]
          %v1065 = vld [vmem:[%s1058 + $0x30] sm:$0xff]
          %v1066 = vld [vmem:[%s1058 + $0x38] sm:$0xff]
          %v1067 = vld [vmem:[%s1058 + $0x40] sm:$0xff]
          %v1068 = vld [vmem:[%s1058 + $0x48] sm:$0xff]
          %v1069 = vld [vmem:[%s1058 + $0x50] sm:$0xff]
          %v1070 = vld [vmem:[%s1058 + $0x58] sm:$0xff]
          %v1071 = vld [vmem:[%s1058 + $0x60] sm:$0xff]
          %v1072 = vld [vmem:[%s1058 + $0x68] sm:$0xff]
          %v1073 = vld [vmem:[%s1058 + $0x70] sm:$0xff]
          %v1074 = vld [vmem:[%s1058 + $0x78] sm:$0xff]
          %v1075 = vld [vmem:[%s1058 + $0x80] sm:$0xff]
          %v1076 = vld [vmem:[%s1058 + $0x88] sm:$0xff]
          %v1077 = vld [vmem:[%s1058 + $0x90] sm:$0xff]
          %v1078 = vld [vmem:[%s1058 + $0x98] sm:$0xff]
          %v1079 = vld [vmem:[%s1058 + $0xa0] sm:$0xff]
          %v1080 = vld [vmem:[%s1058 + $0xa8] sm:$0xff]
          %v1081 = vld [vmem:[%s1058 + $0xb0] sm:$0xff]
          %v1082 = vld [vmem:[%s1058 + $0xb8] sm:$0xff]
          %v1083 = vld [vmem:[%s1058 + $0xc0] sm:$0xff]
          %v1084 = vld [vmem:[%s1058 + $0xc8] sm:$0xff]
          %v1085 = vld [vmem:[%s1058 + $0xd0] sm:$0xff]
          %v1086 = vld [vmem:[%s1058 + $0xd8] sm:$0xff]
          %v1087 = vld [vmem:[%s1058 + $0xe0] sm:$0xff]
          %v1088 = vld [vmem:[%s1058 + $0xe8] sm:$0xff]
          %v1089 = vld [vmem:[%s1058 + $0xf0] sm:$0xff]
          %v1090 = vld [vmem:[%s1058 + $0xf8] sm:$0xff]
          %s1091 = scalar_lea.vmem [#allocation18], 3
          %v1092 = vld [vmem:[%s1091] sm:$0x1]
          %v1094 = vlaneseq
          %v1095 = vshrl.u32 %v1094, 7
          %v1096 = vsub.s32 0, %v1095
          %v1097 = vrot.slane %v1092, %v1096
          %1099 = vmatprep.subr.mxu0 0.0
          %1100 = vmatpush1.msra.mxu0 %v1059
          %1101 = vmatprep.subr.mxu0 0.0
          %1102 = vmatpush1.msra.mxu0 %v1060
          %1103 = vmatprep.subr.mxu0 0.0
          %1104 = vmatpush1.msra.mxu0 %v1061
          %1105 = vmatprep.subr.mxu0 0.0
          %1106 = vmatpush1.msra.mxu0 %v1062
          %1107 = vmatprep.subr.mxu0 0.0
          %1108 = vmatpush1.msra.mxu0 %v1063
          %1109 = vmatprep.subr.mxu0 0.0
          %1110 = vmatpush1.msra.mxu0 %v1064
          %1111 = vmatprep.subr.mxu0 0.0
          %1112 = vmatpush1.msra.mxu0 %v1065
          %1113 = vmatprep.subr.mxu0 0.0
          %1114 = vmatpush1.msra.mxu0 %v1066
          %1115 = vmatprep.subr.mxu0 0.0
          %1116 = vmatpush1.msra.mxu0 %v1067
          %1117 = vmatprep.subr.mxu0 0.0
          %1118 = vmatpush1.msra.mxu0 %v1068
          %1119 = vmatprep.subr.mxu0 0.0
          %1120 = vmatpush1.msra.mxu0 %v1069
          %1121 = vmatprep.subr.mxu0 0.0
          %1122 = vmatpush1.msra.mxu0 %v1070
          %1123 = vmatprep.subr.mxu0 0.0
          %1124 = vmatpush1.msra.mxu0 %v1071
          %1125 = vmatprep.subr.mxu0 0.0
          %1126 = vmatpush1.msra.mxu0 %v1072
          %1127 = vmatprep.subr.mxu0 0.0
          %1128 = vmatpush1.msra.mxu0 %v1073
          %1129 = vmatprep.subr.mxu0 0.0
          %1130 = vmatpush1.msra.mxu0 %v1074
          %1131 = vmatprep.subr.mxu0 0.0
          %1132 = vmatpush1.msra.mxu0 %v1075
          %1133 = vmatprep.subr.mxu0 0.0
          %1134 = vmatpush1.msra.mxu0 %v1076
          %1135 = vmatprep.subr.mxu0 0.0
          %1136 = vmatpush1.msra.mxu0 %v1077
          %1137 = vmatprep.subr.mxu0 0.0
          %1138 = vmatpush1.msra.mxu0 %v1078
          %1139 = vmatprep.subr.mxu0 0.0
          %1140 = vmatpush1.msra.mxu0 %v1079
          %1141 = vmatprep.subr.mxu0 0.0
          %1142 = vmatpush1.msra.mxu0 %v1080
          %1143 = vmatprep.subr.mxu0 0.0
          %1144 = vmatpush1.msra.mxu0 %v1081
          %1145 = vmatprep.subr.mxu0 0.0
          %1146 = vmatpush1.msra.mxu0 %v1082
          %1147 = vmatprep.subr.mxu0 0.0
          %1148 = vmatpush1.msra.mxu0 %v1083
          %1149 = vmatprep.subr.mxu0 0.0
          %1150 = vmatpush1.msra.mxu0 %v1084
          %1151 = vmatprep.subr.mxu0 0.0
          %1152 = vmatpush1.msra.mxu0 %v1085
          %1153 = vmatprep.subr.mxu0 0.0
          %1154 = vmatpush1.msra.mxu0 %v1086
          %1155 = vmatprep.subr.mxu0 0.0
          %1156 = vmatpush1.msra.mxu0 %v1087
          %1157 = vmatprep.subr.mxu0 0.0
          %1158 = vmatpush1.msra.mxu0 %v1088
          %1159 = vmatprep.subr.mxu0 0.0
          %1160 = vmatpush1.msra.mxu0 %v1089
          %1161 = vmatprep.subr.mxu0 0.0
          %1162 = vmatpush1.msra.mxu0 %v1090
          %1163 = vmatprep.mubr.f32.mxu0 %v700
          %1164 = vmatmul.mubr.f32.gmra.mrb[0].mxu0 %v699
          %v1165 = vpop.f32.mrb[0].mxu0
          %v1166 = vadd.f32 %v1097, %v1165
          %v1167 = vpop.f32.mrb[0].mxu0
          %1168 = vmatprep.mubr.f32.mxu0 %v702
          %1169 = vmatmul.mubr.f32.gmra.mrb[0].mxu0 %v701
          %v1170 = vpop.f32.mrb[0].mxu0
          %v1171 = vadd.f32 %v1097, %v1170
          %v1172 = vpop.f32.mrb[0].mxu0
          %1173 = vdwg.mxu0
          %s1174 = scalar_lea.vmem [#allocation2], 48
          %1175 = vst.msk [vmem:[%s1174] sm:$0xff] %vm817, %v1166
          %1176 = vst.msk [vmem:[%s1174 + $0x8] sm:$0xff] %vm817, %v1171
          %v1177 = vld [vmem:[%s606] sm:$0xff]
          %v1178 = vld [vmem:[%s606 + $0x8] sm:$0xff]
          %1179 = vadd.xlane.f32.xlu0 %v1177
          %v1180 = vpop.xlane.xlu0 %1179
          %1181 = vadd.xlane.f32.xlu0 %v1178
          %v1182 = vpop.xlane.xlu0 %1181
          %v1183 = vrcp.pop 128.0
          %v1184 = vmul.f32 %v1180, %v1183
          %v1185 = vmul.f32 %v1182, %v1183
          %v1186 = vsub.f32 %v1177, %v1184
          %v1187 = vsub.f32 %v1178, %v1185
          %v1188 = vmul.f32 %v1186, %v1186
          %v1189 = vmul.f32 %v1187, %v1187
          %1190 = vadd.xlane.f32.xlu0 %v1188
          %v1191 = vpop.xlane.xlu0 %1190
          %1192 = vadd.xlane.f32.xlu0 %v1189
          %v1193 = vpop.xlane.xlu0 %1192
          %v1194 = vmul.f32 %v1191, %v1183
          %v1195 = vmul.f32 %v1193, %v1183
          %v1196 = vadd.f32 %v1194, 1e-05
          %v1197 = vadd.f32 %v1195, 1e-05
          %v1198 = vrsqrt.pop %v1196
          %v1199 = vrsqrt.pop %v1197
          %v1200 = vmul.f32 %v1186, %v1198
          %v1201 = vmul.f32 %v1187, %v1199
          %v1202 = vld [vmem:[#allocation19] sm:$0x1]
          %v1204 = vlaneseq
          %v1205 = vshrl.u32 %v1204, 7
          %v1206 = vsub.s32 0, %v1205
          %v1207 = vrot.slane %v1202, %v1206
          %v1209 = vmul.f32 %v1200, %v1207
          %v1210 = vmul.f32 %v1201, %v1207
          %v1211 = vld [vmem:[#allocation21] sm:$0x1]
          %v1213 = vlaneseq
          %v1214 = vshrl.u32 %v1213, 7
          %v1215 = vsub.s32 0, %v1214
          %v1216 = vrot.slane %v1211, %v1215
          %v1218 = vadd.f32 %v1209, %v1216
          %v1219 = vadd.f32 %v1210, %v1216
          %1220 = vst [vmem:[#allocation3] sm:$0xff] %v1218
          %1221 = vst [vmem:[#allocation3 + $0x8] sm:$0xff] %v1219
        $region112: #{tpu_custom_call.1} parent=63 // pred_fallthru
          _
        %v1222 = vld [vmem:[%s579] sm:$0xff]
        %v1223 = vld [vmem:[%s579 + $0x8] sm:$0xff]
        %v1224 = vld [vmem:[#allocation13] sm:$0xff]
        %v1225 = vld [vmem:[#allocation13 + $0x8] sm:$0xff]
        %v1226 = vld [vmem:[#allocation13 + $0x10] sm:$0xff]
        %v1227 = vld [vmem:[#allocation13 + $0x18] sm:$0xff]
        %v1228 = vld [vmem:[#allocation13 + $0x20] sm:$0xff]
        %v1229 = vld [vmem:[#allocation13 + $0x28] sm:$0xff]
        %v1230 = vld [vmem:[#allocation13 + $0x30] sm:$0xff]
        %v1231 = vld [vmem:[#allocation13 + $0x38] sm:$0xff]
        %v1232 = vld [vmem:[#allocation13 + $0x40] sm:$0xff]
        %v1233 = vld [vmem:[#allocation13 + $0x48] sm:$0xff]
        %v1234 = vld [vmem:[#allocation13 + $0x50] sm:$0xff]
        %v1235 = vld [vmem:[#allocation13 + $0x58] sm:$0xff]
        %v1236 = vld [vmem:[#allocation13 + $0x60] sm:$0xff]
        %v1237 = vld [vmem:[#allocation13 + $0x68] sm:$0xff]
        %v1238 = vld [vmem:[#allocation13 + $0x70] sm:$0xff]
        %v1239 = vld [vmem:[#allocation13 + $0x78] sm:$0xff]
        %v1240 = vld [vmem:[#allocation13 + $0x80] sm:$0xff]
        %v1241 = vld [vmem:[#allocation13 + $0x88] sm:$0xff]
        %v1242 = vld [vmem:[#allocation13 + $0x90] sm:$0xff]
        %v1243 = vld [vmem:[#allocation13 + $0x98] sm:$0xff]
        %v1244 = vld [vmem:[#allocation13 + $0xa0] sm:$0xff]
        %v1245 = vld [vmem:[#allocation13 + $0xa8] sm:$0xff]
        %v1246 = vld [vmem:[#allocation13 + $0xb0] sm:$0xff]
        %v1247 = vld [vmem:[#allocation13 + $0xb8] sm:$0xff]
        %v1248 = vld [vmem:[#allocation13 + $0xc0] sm:$0xff]
        %v1249 = vld [vmem:[#allocation13 + $0xc8] sm:$0xff]
        %v1250 = vld [vmem:[#allocation13 + $0xd0] sm:$0xff]
        %v1251 = vld [vmem:[#allocation13 + $0xd8] sm:$0xff]
        %v1252 = vld [vmem:[#allocation13 + $0xe0] sm:$0xff]
        %v1253 = vld [vmem:[#allocation13 + $0xe8] sm:$0xff]
        %v1254 = vld [vmem:[#allocation13 + $0xf0] sm:$0xff]
        %v1255 = vld [vmem:[#allocation13 + $0xf8] sm:$0xff]
        %v1256 = vld [vmem:[#allocation15] sm:$0x1]
        %v1258 = vlaneseq
        %v1259 = vshrl.u32 %v1258, 7
        %v1260 = vsub.s32 0, %v1259
        %v1261 = vrot.slane %v1256, %v1260
        %1263 = vmatprep.subr.mxu0 0.0
        %1264 = vmatpush1.msra.mxu0 %v1224
        %1265 = vmatprep.subr.mxu0 0.0
        %1266 = vmatpush1.msra.mxu0 %v1225
        %1267 = vmatprep.subr.mxu0 0.0
        %1268 = vmatpush1.msra.mxu0 %v1226
        %1269 = vmatprep.subr.mxu0 0.0
        %1270 = vmatpush1.msra.mxu0 %v1227
        %1271 = vmatprep.subr.mxu0 0.0
        %1272 = vmatpush1.msra.mxu0 %v1228
        %1273 = vmatprep.subr.mxu0 0.0
        %1274 = vmatpush1.msra.mxu0 %v1229
        %1275 = vmatprep.subr.mxu0 0.0
        %1276 = vmatpush1.msra.mxu0 %v1230
        %1277 = vmatprep.subr.mxu0 0.0
        %1278 = vmatpush1.msra.mxu0 %v1231
        %1279 = vmatprep.subr.mxu0 0.0
        %1280 = vmatpush1.msra.mxu0 %v1232
        %1281 = vmatprep.subr.mxu0 0.0
        %1282 = vmatpush1.msra.mxu0 %v1233
        %1283 = vmatprep.subr.mxu0 0.0
        %1284 = vmatpush1.msra.mxu0 %v1234
        %1285 = vmatprep.subr.mxu0 0.0
        %1286 = vmatpush1.msra.mxu0 %v1235
        %1287 = vmatprep.subr.mxu0 0.0
        %1288 = vmatpush1.msra.mxu0 %v1236
        %1289 = vmatprep.subr.mxu0 0.0
        %1290 = vmatpush1.msra.mxu0 %v1237
        %1291 = vmatprep.subr.mxu0 0.0
        %1292 = vmatpush1.msra.mxu0 %v1238
        %1293 = vmatprep.subr.mxu0 0.0
        %1294 = vmatpush1.msra.mxu0 %v1239
        %1295 = vmatprep.subr.mxu0 0.0
        %1296 = vmatpush1.msra.mxu0 %v1240
        %1297 = vmatprep.subr.mxu0 0.0
        %1298 = vmatpush1.msra.mxu0 %v1241
        %1299 = vmatprep.subr.mxu0 0.0
        %1300 = vmatpush1.msra.mxu0 %v1242
        %1301 = vmatprep.subr.mxu0 0.0
        %1302 = vmatpush1.msra.mxu0 %v1243
        %1303 = vmatprep.subr.mxu0 0.0
        %1304 = vmatpush1.msra.mxu0 %v1244
        %1305 = vmatprep.subr.mxu0 0.0
        %1306 = vmatpush1.msra.mxu0 %v1245
        %1307 = vmatprep.subr.mxu0 0.0
        %1308 = vmatpush1.msra.mxu0 %v1246
        %1309 = vmatprep.subr.mxu0 0.0
        %1310 = vmatpush1.msra.mxu0 %v1247
        %1311 = vmatprep.subr.mxu0 0.0
        %1312 = vmatpush1.msra.mxu0 %v1248
        %1313 = vmatprep.subr.mxu0 0.0
        %1314 = vmatpush1.msra.mxu0 %v1249
        %1315 = vmatprep.subr.mxu0 0.0
        %1316 = vmatpush1.msra.mxu0 %v1250
        %1317 = vmatprep.subr.mxu0 0.0
        %1318 = vmatpush1.msra.mxu0 %v1251
        %1319 = vmatprep.subr.mxu0 0.0
        %1320 = vmatpush1.msra.mxu0 %v1252
        %1321 = vmatprep.subr.mxu0 0.0
        %1322 = vmatpush1.msra.mxu0 %v1253
        %1323 = vmatprep.subr.mxu0 0.0
        %1324 = vmatpush1.msra.mxu0 %v1254
        %1325 = vmatprep.subr.mxu0 0.0
        %1326 = vmatpush1.msra.mxu0 %v1255
        %1327 = vmatprep.mubr.f32.mxu0 %v1223
        %1328 = vmatmul.mubr.f32.gmra.mrb[0].mxu0 %v1222
        %v1329 = vpop.f32.mrb[0].mxu0
        %v1330 = vadd.f32 %v1261, %v1329
        %v1331 = vpop.f32.mrb[0].mxu0
        %1332 = vdwg.mxu0
        %v1333 = vld [vmem:[#allocation2] sm:$0xff]
        %v1334 = vld [vmem:[#allocation2 + $0x8] sm:$0xff]
        %vm1335 = vcmask 523264
        %v1337 = vsel %vm1335, %v1330, 0
        %v1340 = vsel %vm1335, %v1333, 0
        %v1343 = vsel %vm1335, %v1334, 0
        %1345 = vmatprep.subr.mxu0 0.0
        %1346 = vmatpush1.xpose.msra.mxu0 %v1340
        %1347 = vmatprep.subr.mxu0 0.0
        %1348 = vmatpush1.xpose.msra.mxu0 %v1343
        %1349 = vmatprep.subr.mxu0 0.0
        %1350 = vmatpush1.xpose.msra.mxu0 0.0
        %1351 = vmatprep.subr.mxu0 0.0
        %1352 = vmatpush1.xpose.msra.mxu0 0.0
        %1353 = vmatprep.subr.mxu0 0.0
        %1354 = vmatpush1.xpose.msra.mxu0 0.0
        %1355 = vmatprep.subr.mxu0 0.0
        %1356 = vmatpush1.xpose.msra.mxu0 0.0
        %1357 = vmatprep.subr.mxu0 0.0
        %1358 = vmatpush1.xpose.msra.mxu0 0.0
        %1359 = vmatprep.subr.mxu0 0.0
        %1360 = vmatpush1.xpose.msra.mxu0 0.0
        %1361 = vmatprep.subr.mxu0 0.0
        %1362 = vmatpush1.xpose.msra.mxu0 0.0
        %1363 = vmatprep.subr.mxu0 0.0
        %1364 = vmatpush1.xpose.msra.mxu0 0.0
        %1365 = vmatprep.subr.mxu0 0.0
        %1366 = vmatpush1.xpose.msra.mxu0 0.0
        %1367 = vmatprep.subr.mxu0 0.0
        %1368 = vmatpush1.xpose.msra.mxu0 0.0
        %1369 = vmatprep.subr.mxu0 0.0
        %1370 = vmatpush1.xpose.msra.mxu0 0.0
        %1371 = vmatprep.subr.mxu0 0.0
        %1372 = vmatpush1.xpose.msra.mxu0 0.0
        %1373 = vmatprep.subr.mxu0 0.0
        %1374 = vmatpush1.xpose.msra.mxu0 0.0
        %1375 = vmatprep.subr.mxu0 0.0
        %1376 = vmatpush1.xpose.msra.mxu0 0.0
        %1377 = vmatprep.subr.mxu0 0.0
        %1378 = vmatpush1.xpose.msra.mxu0 0.0
        %1379 = vmatprep.subr.mxu0 0.0
        %1380 = vmatpush1.xpose.msra.mxu0 0.0
        %1381 = vmatprep.subr.mxu0 0.0
        %1382 = vmatpush1.xpose.msra.mxu0 0.0
        %1383 = vmatprep.subr.mxu0 0.0
        %1384 = vmatpush1.xpose.msra.mxu0 0.0
        %1385 = vmatprep.subr.mxu0 0.0
        %1386 = vmatpush1.xpose.msra.mxu0 0.0
        %1387 = vmatprep.subr.mxu0 0.0
        %1388 = vmatpush1.xpose.msra.mxu0 0.0
        %1389 = vmatprep.subr.mxu0 0.0
        %1390 = vmatpush1.xpose.msra.mxu0 0.0
        %1391 = vmatprep.subr.mxu0 0.0
        %1392 = vmatpush1.xpose.msra.mxu0 0.0
        %1393 = vmatprep.subr.mxu0 0.0
        %1394 = vmatpush1.xpose.msra.mxu0 0.0
        %1395 = vmatprep.subr.mxu0 0.0
        %1396 = vmatpush1.xpose.msra.mxu0 0.0
        %1397 = vmatprep.subr.mxu0 0.0
        %1398 = vmatpush1.xpose.msra.mxu0 0.0
        %1399 = vmatprep.subr.mxu0 0.0
        %1400 = vmatpush1.xpose.msra.mxu0 0.0
        %1401 = vmatprep.subr.mxu0 0.0
        %1402 = vmatpush1.xpose.msra.mxu0 0.0
        %1403 = vmatprep.subr.mxu0 0.0
        %1404 = vmatpush1.xpose.msra.mxu0 0.0
        %1405 = vmatprep.subr.mxu0 0.0
        %1406 = vmatpush1.xpose.msra.mxu0 0.0
        %1407 = vmatprep.subr.mxu0 0.0
        %1408 = vmatpush1.xpose.msra.mxu0 0.0
        %1409 = vmatprep.mubr.f32.mxu0 0.0
        %1410 = vmatmul.mubr.f32.gmra.mrb[0].mxu0 %v1337
        %v1411 = vpop.f32.mrb[0].mxu0
        %v1412 = vadd.f32 0.0, %v1411
        %v1413 = vpop.f32.mrb[0].mxu0
        %1414 = vdwg.mxu0
        %s1415 = scalar_lea.vmem [#allocation13], 256
        %v1416 = vld [vmem:[%s1415] sm:$0xff]
        %v1417 = vld [vmem:[%s1415 + $0x8] sm:$0xff]
        %v1418 = vld [vmem:[%s1415 + $0x10] sm:$0xff]
        %v1419 = vld [vmem:[%s1415 + $0x18] sm:$0xff]
        %v1420 = vld [vmem:[%s1415 + $0x20] sm:$0xff]
        %v1421 = vld [vmem:[%s1415 + $0x28] sm:$0xff]
        %v1422 = vld [vmem:[%s1415 + $0x30] sm:$0xff]
        %v1423 = vld [vmem:[%s1415 + $0x38] sm:$0xff]
        %v1424 = vld [vmem:[%s1415 + $0x40] sm:$0xff]
        %v1425 = vld [vmem:[%s1415 + $0x48] sm:$0xff]
        %v1426 = vld [vmem:[%s1415 + $0x50] sm:$0xff]
        %v1427 = vld [vmem:[%s1415 + $0x58] sm:$0xff]
        %v1428 = vld [vmem:[%s1415 + $0x60] sm:$0xff]
        %v1429 = vld [vmem:[%s1415 + $0x68] sm:$0xff]
        %v1430 = vld [vmem:[%s1415 + $0x70] sm:$0xff]
        %v1431 = vld [vmem:[%s1415 + $0x78] sm:$0xff]
        %v1432 = vld [vmem:[%s1415 + $0x80] sm:$0xff]
        %v1433 = vld [vmem:[%s1415 + $0x88] sm:$0xff]
        %v1434 = vld [vmem:[%s1415 + $0x90] sm:$0xff]
        %v1435 = vld [vmem:[%s1415 + $0x98] sm:$0xff]
        %v1436 = vld [vmem:[%s1415 + $0xa0] sm:$0xff]
        %v1437 = vld [vmem:[%s1415 + $0xa8] sm:$0xff]
        %v1438 = vld [vmem:[%s1415 + $0xb0] sm:$0xff]
        %v1439 = vld [vmem:[%s1415 + $0xb8] sm:$0xff]
        %v1440 = vld [vmem:[%s1415 + $0xc0] sm:$0xff]
        %v1441 = vld [vmem:[%s1415 + $0xc8] sm:$0xff]
        %v1442 = vld [vmem:[%s1415 + $0xd0] sm:$0xff]
        %v1443 = vld [vmem:[%s1415 + $0xd8] sm:$0xff]
        %v1444 = vld [vmem:[%s1415 + $0xe0] sm:$0xff]
        %v1445 = vld [vmem:[%s1415 + $0xe8] sm:$0xff]
        %v1446 = vld [vmem:[%s1415 + $0xf0] sm:$0xff]
        %v1447 = vld [vmem:[%s1415 + $0xf8] sm:$0xff]
        %s1448 = scalar_lea.vmem [#allocation15], 1
        %v1449 = vld [vmem:[%s1448] sm:$0x1]
        %v1451 = vlaneseq
        %v1452 = vshrl.u32 %v1451, 7
        %v1453 = vsub.s32 0, %v1452
        %v1454 = vrot.slane %v1449, %v1453
        %1456 = vmatprep.subr.mxu0 0.0
        %1457 = vmatpush1.msra.mxu0 %v1416
        %1458 = vmatprep.subr.mxu0 0.0
        %1459 = vmatpush1.msra.mxu0 %v1417
        %1460 = vmatprep.subr.mxu0 0.0
        %1461 = vmatpush1.msra.mxu0 %v1418
        %1462 = vmatprep.subr.mxu0 0.0
        %1463 = vmatpush1.msra.mxu0 %v1419
        %1464 = vmatprep.subr.mxu0 0.0
        %1465 = vmatpush1.msra.mxu0 %v1420
        %1466 = vmatprep.subr.mxu0 0.0
        %1467 = vmatpush1.msra.mxu0 %v1421
        %1468 = vmatprep.subr.mxu0 0.0
        %1469 = vmatpush1.msra.mxu0 %v1422
        %1470 = vmatprep.subr.mxu0 0.0
        %1471 = vmatpush1.msra.mxu0 %v1423
        %1472 = vmatprep.subr.mxu0 0.0
        %1473 = vmatpush1.msra.mxu0 %v1424
        %1474 = vmatprep.subr.mxu0 0.0
        %1475 = vmatpush1.msra.mxu0 %v1425
        %1476 = vmatprep.subr.mxu0 0.0
        %1477 = vmatpush1.msra.mxu0 %v1426
        %1478 = vmatprep.subr.mxu0 0.0
        %1479 = vmatpush1.msra.mxu0 %v1427
        %1480 = vmatprep.subr.mxu0 0.0
        %1481 = vmatpush1.msra.mxu0 %v1428
        %1482 = vmatprep.subr.mxu0 0.0
        %1483 = vmatpush1.msra.mxu0 %v1429
        %1484 = vmatprep.subr.mxu0 0.0
        %1485 = vmatpush1.msra.mxu0 %v1430
        %1486 = vmatprep.subr.mxu0 0.0
        %1487 = vmatpush1.msra.mxu0 %v1431
        %1488 = vmatprep.subr.mxu0 0.0
        %1489 = vmatpush1.msra.mxu0 %v1432
        %1490 = vmatprep.subr.mxu0 0.0
        %1491 = vmatpush1.msra.mxu0 %v1433
        %1492 = vmatprep.subr.mxu0 0.0
        %1493 = vmatpush1.msra.mxu0 %v1434
        %1494 = vmatprep.subr.mxu0 0.0
        %1495 = vmatpush1.msra.mxu0 %v1435
        %1496 = vmatprep.subr.mxu0 0.0
        %1497 = vmatpush1.msra.mxu0 %v1436
        %1498 = vmatprep.subr.mxu0 0.0
        %1499 = vmatpush1.msra.mxu0 %v1437
        %1500 = vmatprep.subr.mxu0 0.0
        %1501 = vmatpush1.msra.mxu0 %v1438
        %1502 = vmatprep.subr.mxu0 0.0
        %1503 = vmatpush1.msra.mxu0 %v1439
        %1504 = vmatprep.subr.mxu0 0.0
        %1505 = vmatpush1.msra.mxu0 %v1440
        %1506 = vmatprep.subr.mxu0 0.0
        %1507 = vmatpush1.msra.mxu0 %v1441
        %1508 = vmatprep.subr.mxu0 0.0
        %1509 = vmatpush1.msra.mxu0 %v1442
        %1510 = vmatprep.subr.mxu0 0.0
        %1511 = vmatpush1.msra.mxu0 %v1443
        %1512 = vmatprep.subr.mxu0 0.0
        %1513 = vmatpush1.msra.mxu0 %v1444
        %1514 = vmatprep.subr.mxu0 0.0
        %1515 = vmatpush1.msra.mxu0 %v1445
        %1516 = vmatprep.subr.mxu0 0.0
        %1517 = vmatpush1.msra.mxu0 %v1446
        %1518 = vmatprep.subr.mxu0 0.0
        %1519 = vmatpush1.msra.mxu0 %v1447
        %1520 = vmatprep.mubr.f32.mxu0 %v1223
        %1521 = vmatmul.mubr.f32.gmra.mrb[0].mxu0 %v1222
        %v1522 = vpop.f32.mrb[0].mxu0
        %v1523 = vadd.f32 %v1454, %v1522
        %v1524 = vpop.f32.mrb[0].mxu0
        %1525 = vdwg.mxu0
        %s1526 = scalar_lea.vmem [#allocation2], 16
        %v1527 = vld [vmem:[%s1526] sm:$0xff]
        %v1528 = vld [vmem:[%s1526 + $0x8] sm:$0xff]
        %v1530 = vsel %vm1335, %v1523, 0
        %v1533 = vsel %vm1335, %v1527, 0
        %v1536 = vsel %vm1335, %v1528, 0
        %1538 = vmatprep.subr.mxu0 0.0
        %1539 = vmatpush1.xpose.msra.mxu0 %v1533
        %1540 = vmatprep.subr.mxu0 0.0
        %1541 = vmatpush1.xpose.msra.mxu0 %v1536
        %1542 = vmatprep.subr.mxu0 0.0
        %1543 = vmatpush1.xpose.msra.mxu0 0.0
        %1544 = vmatprep.subr.mxu0 0.0
        %1545 = vmatpush1.xpose.msra.mxu0 0.0
        %1546 = vmatprep.subr.mxu0 0.0
        %1547 = vmatpush1.xpose.msra.mxu0 0.0
        %1548 = vmatprep.subr.mxu0 0.0
        %1549 = vmatpush1.xpose.msra.mxu0 0.0
        %1550 = vmatprep.subr.mxu0 0.0
        %1551 = vmatpush1.xpose.msra.mxu0 0.0
        %1552 = vmatprep.subr.mxu0 0.0
        %1553 = vmatpush1.xpose.msra.mxu0 0.0
        %1554 = vmatprep.subr.mxu0 0.0
        %1555 = vmatpush1.xpose.msra.mxu0 0.0
        %1556 = vmatprep.subr.mxu0 0.0
        %1557 = vmatpush1.xpose.msra.mxu0 0.0
        %1558 = vmatprep.subr.mxu0 0.0
        %1559 = vmatpush1.xpose.msra.mxu0 0.0
        %1560 = vmatprep.subr.mxu0 0.0
        %1561 = vmatpush1.xpose.msra.mxu0 0.0
        %1562 = vmatprep.subr.mxu0 0.0
        %1563 = vmatpush1.xpose.msra.mxu0 0.0
        %1564 = vmatprep.subr.mxu0 0.0
        %1565 = vmatpush1.xpose.msra.mxu0 0.0
        %1566 = vmatprep.subr.mxu0 0.0
        %1567 = vmatpush1.xpose.msra.mxu0 0.0
        %1568 = vmatprep.subr.mxu0 0.0
        %1569 = vmatpush1.xpose.msra.mxu0 0.0
        %1570 = vmatprep.subr.mxu0 0.0
        %1571 = vmatpush1.xpose.msra.mxu0 0.0
        %1572 = vmatprep.subr.mxu0 0.0
        %1573 = vmatpush1.xpose.msra.mxu0 0.0
        %1574 = vmatprep.subr.mxu0 0.0
        %1575 = vmatpush1.xpose.msra.mxu0 0.0
        %1576 = vmatprep.subr.mxu0 0.0
        %1577 = vmatpush1.xpose.msra.mxu0 0.0
        %1578 = vmatprep.subr.mxu0 0.0
        %1579 = vmatpush1.xpose.msra.mxu0 0.0
        %1580 = vmatprep.subr.mxu0 0.0
        %1581 = vmatpush1.xpose.msra.mxu0 0.0
        %1582 = vmatprep.subr.mxu0 0.0
        %1583 = vmatpush1.xpose.msra.mxu0 0.0
        %1584 = vmatprep.subr.mxu0 0.0
        %1585 = vmatpush1.xpose.msra.mxu0 0.0
        %1586 = vmatprep.subr.mxu0 0.0
        %1587 = vmatpush1.xpose.msra.mxu0 0.0
        %1588 = vmatprep.subr.mxu0 0.0
        %1589 = vmatpush1.xpose.msra.mxu0 0.0
        %1590 = vmatprep.subr.mxu0 0.0
        %1591 = vmatpush1.xpose.msra.mxu0 0.0
        %1592 = vmatprep.subr.mxu0 0.0
        %1593 = vmatpush1.xpose.msra.mxu0 0.0
        %1594 = vmatprep.subr.mxu0 0.0
        %1595 = vmatpush1.xpose.msra.mxu0 0.0
        %1596 = vmatprep.subr.mxu0 0.0
        %1597 = vmatpush1.xpose.msra.mxu0 0.0
        %1598 = vmatprep.subr.mxu0 0.0
        %1599 = vmatpush1.xpose.msra.mxu0 0.0
        %1600 = vmatprep.subr.mxu0 0.0
        %1601 = vmatpush1.xpose.msra.mxu0 0.0
        %1602 = vmatprep.mubr.f32.mxu0 0.0
        %1603 = vmatmul.mubr.f32.gmra.mrb[0].mxu0 %v1530
        %v1604 = vpop.f32.mrb[0].mxu0
        %v1605 = vadd.f32 0.0, %v1604
        %v1606 = vpop.f32.mrb[0].mxu0
        %1607 = vdwg.mxu0
        %v1608 = vmax.f32 %v1412, %v1605
        %s1609 = scalar_lea.vmem [#allocation13], 512
        %v1610 = vld [vmem:[%s1609] sm:$0xff]
        %v1611 = vld [vmem:[%s1609 + $0x8] sm:$0xff]
        %v1612 = vld [vmem:[%s1609 + $0x10] sm:$0xff]
        %v1613 = vld [vmem:[%s1609 + $0x18] sm:$0xff]
        %v1614 = vld [vmem:[%s1609 + $0x20] sm:$0xff]
        %v1615 = vld [vmem:[%s1609 + $0x28] sm:$0xff]
        %v1616 = vld [vmem:[%s1609 + $0x30] sm:$0xff]
        %v1617 = vld [vmem:[%s1609 + $0x38] sm:$0xff]
        %v1618 = vld [vmem:[%s1609 + $0x40] sm:$0xff]
        %v1619 = vld [vmem:[%s1609 + $0x48] sm:$0xff]
        %v1620 = vld [vmem:[%s1609 + $0x50] sm:$0xff]
        %v1621 = vld [vmem:[%s1609 + $0x58] sm:$0xff]
        %v1622 = vld [vmem:[%s1609 + $0x60] sm:$0xff]
        %v1623 = vld [vmem:[%s1609 + $0x68] sm:$0xff]
        %v1624 = vld [vmem:[%s1609 + $0x70] sm:$0xff]
        %v1625 = vld [vmem:[%s1609 + $0x78] sm:$0xff]
        %v1626 = vld [vmem:[%s1609 + $0x80] sm:$0xff]
        %v1627 = vld [vmem:[%s1609 + $0x88] sm:$0xff]
        %v1628 = vld [vmem:[%s1609 + $0x90] sm:$0xff]
        %v1629 = vld [vmem:[%s1609 + $0x98] sm:$0xff]
        %v1630 = vld [vmem:[%s1609 + $0xa0] sm:$0xff]
        %v1631 = vld [vmem:[%s1609 + $0xa8] sm:$0xff]
        %v1632 = vld [vmem:[%s1609 + $0xb0] sm:$0xff]
        %v1633 = vld [vmem:[%s1609 + $0xb8] sm:$0xff]
        %v1634 = vld [vmem:[%s1609 + $0xc0] sm:$0xff]
        %v1635 = vld [vmem:[%s1609 + $0xc8] sm:$0xff]
        %v1636 = vld [vmem:[%s1609 + $0xd0] sm:$0xff]
        %v1637 = vld [vmem:[%s1609 + $0xd8] sm:$0xff]
        %v1638 = vld [vmem:[%s1609 + $0xe0] sm:$0xff]
        %v1639 = vld [vmem:[%s1609 + $0xe8] sm:$0xff]
        %v1640 = vld [vmem:[%s1609 + $0xf0] sm:$0xff]
        %v1641 = vld [vmem:[%s1609 + $0xf8] sm:$0xff]
        %s1642 = scalar_lea.vmem [#allocation15], 2
        %v1643 = vld [vmem:[%s1642] sm:$0x1]
        %v1645 = vlaneseq
        %v1646 = vshrl.u32 %v1645, 7
        %v1647 = vsub.s32 0, %v1646
        %v1648 = vrot.slane %v1643, %v1647
        %1650 = vmatprep.subr.mxu0 0.0
        %1651 = vmatpush1.msra.mxu0 %v1610
        %1652 = vmatprep.subr.mxu0 0.0
        %1653 = vmatpush1.msra.mxu0 %v1611
        %1654 = vmatprep.subr.mxu0 0.0
        %1655 = vmatpush1.msra.mxu0 %v1612
        %1656 = vmatprep.subr.mxu0 0.0
        %1657 = vmatpush1.msra.mxu0 %v1613
        %1658 = vmatprep.subr.mxu0 0.0
        %1659 = vmatpush1.msra.mxu0 %v1614
        %1660 = vmatprep.subr.mxu0 0.0
        %1661 = vmatpush1.msra.mxu0 %v1615
        %1662 = vmatprep.subr.mxu0 0.0
        %1663 = vmatpush1.msra.mxu0 %v1616
        %1664 = vmatprep.subr.mxu0 0.0
        %1665 = vmatpush1.msra.mxu0 %v1617
        %1666 = vmatprep.subr.mxu0 0.0
        %1667 = vmatpush1.msra.mxu0 %v1618
        %1668 = vmatprep.subr.mxu0 0.0
        %1669 = vmatpush1.msra.mxu0 %v1619
        %1670 = vmatprep.subr.mxu0 0.0
        %1671 = vmatpush1.msra.mxu0 %v1620
        %1672 = vmatprep.subr.mxu0 0.0
        %1673 = vmatpush1.msra.mxu0 %v1621
        %1674 = vmatprep.subr.mxu0 0.0
        %1675 = vmatpush1.msra.mxu0 %v1622
        %1676 = vmatprep.subr.mxu0 0.0
        %1677 = vmatpush1.msra.mxu0 %v1623
        %1678 = vmatprep.subr.mxu0 0.0
        %1679 = vmatpush1.msra.mxu0 %v1624
        %1680 = vmatprep.subr.mxu0 0.0
        %1681 = vmatpush1.msra.mxu0 %v1625
        %1682 = vmatprep.subr.mxu0 0.0
        %1683 = vmatpush1.msra.mxu0 %v1626
        %1684 = vmatprep.subr.mxu0 0.0
        %1685 = vmatpush1.msra.mxu0 %v1627
        %1686 = vmatprep.subr.mxu0 0.0
        %1687 = vmatpush1.msra.mxu0 %v1628
        %1688 = vmatprep.subr.mxu0 0.0
        %1689 = vmatpush1.msra.mxu0 %v1629
        %1690 = vmatprep.subr.mxu0 0.0
        %1691 = vmatpush1.msra.mxu0 %v1630
        %1692 = vmatprep.subr.mxu0 0.0
        %1693 = vmatpush1.msra.mxu0 %v1631
        %1694 = vmatprep.subr.mxu0 0.0
        %1695 = vmatpush1.msra.mxu0 %v1632
        %1696 = vmatprep.subr.mxu0 0.0
        %1697 = vmatpush1.msra.mxu0 %v1633
        %1698 = vmatprep.subr.mxu0 0.0
        %1699 = vmatpush1.msra.mxu0 %v1634
        %1700 = vmatprep.subr.mxu0 0.0
        %1701 = vmatpush1.msra.mxu0 %v1635
        %1702 = vmatprep.subr.mxu0 0.0
        %1703 = vmatpush1.msra.mxu0 %v1636
        %1704 = vmatprep.subr.mxu0 0.0
        %1705 = vmatpush1.msra.mxu0 %v1637
        %1706 = vmatprep.subr.mxu0 0.0
        %1707 = vmatpush1.msra.mxu0 %v1638
        %1708 = vmatprep.subr.mxu0 0.0
        %1709 = vmatpush1.msra.mxu0 %v1639
        %1710 = vmatprep.subr.mxu0 0.0
        %1711 = vmatpush1.msra.mxu0 %v1640
        %1712 = vmatprep.subr.mxu0 0.0
        %1713 = vmatpush1.msra.mxu0 %v1641
        %1714 = vmatprep.mubr.f32.mxu0 %v1223
        %1715 = vmatmul.mubr.f32.gmra.mrb[0].mxu0 %v1222
        %v1716 = vpop.f32.mrb[0].mxu0
        %v1717 = vadd.f32 %v1648, %v1716
        %v1718 = vpop.f32.mrb[0].mxu0
        %1719 = vdwg.mxu0
        %s1720 = scalar_lea.vmem [#allocation2], 32
        %v1721 = vld [vmem:[%s1720] sm:$0xff]
        %v1722 = vld [vmem:[%s1720 + $0x8] sm:$0xff]
        %v1724 = vsel %vm1335, %v1717, 0
        %v1727 = vsel %vm1335, %v1721, 0
        %v1730 = vsel %vm1335, %v1722, 0
        %1732 = vmatprep.subr.mxu0 0.0
        %1733 = vmatpush1.xpose.msra.mxu0 %v1727
        %1734 = vmatprep.subr.mxu0 0.0
        %1735 = vmatpush1.xpose.msra.mxu0 %v1730
        %1736 = vmatprep.subr.mxu0 0.0
        %1737 = vmatpush1.xpose.msra.mxu0 0.0
        %1738 = vmatprep.subr.mxu0 0.0
        %1739 = vmatpush1.xpose.msra.mxu0 0.0
        %1740 = vmatprep.subr.mxu0 0.0
        %1741 = vmatpush1.xpose.msra.mxu0 0.0
        %1742 = vmatprep.subr.mxu0 0.0
        %1743 = vmatpush1.xpose.msra.mxu0 0.0
        %1744 = vmatprep.subr.mxu0 0.0
        %1745 = vmatpush1.xpose.msra.mxu0 0.0
        %1746 = vmatprep.subr.mxu0 0.0
        %1747 = vmatpush1.xpose.msra.mxu0 0.0
        %1748 = vmatprep.subr.mxu0 0.0
        %1749 = vmatpush1.xpose.msra.mxu0 0.0
        %1750 = vmatprep.subr.mxu0 0.0
        %1751 = vmatpush1.xpose.msra.mxu0 0.0
        %1752 = vmatprep.subr.mxu0 0.0
        %1753 = vmatpush1.xpose.msra.mxu0 0.0
        %1754 = vmatprep.subr.mxu0 0.0
        %1755 = vmatpush1.xpose.msra.mxu0 0.0
        %1756 = vmatprep.subr.mxu0 0.0
        %1757 = vmatpush1.xpose.msra.mxu0 0.0
        %1758 = vmatprep.subr.mxu0 0.0
        %1759 = vmatpush1.xpose.msra.mxu0 0.0
        %1760 = vmatprep.subr.mxu0 0.0
        %1761 = vmatpush1.xpose.msra.mxu0 0.0
        %1762 = vmatprep.subr.mxu0 0.0
        %1763 = vmatpush1.xpose.msra.mxu0 0.0
        %1764 = vmatprep.subr.mxu0 0.0
        %1765 = vmatpush1.xpose.msra.mxu0 0.0
        %1766 = vmatprep.subr.mxu0 0.0
        %1767 = vmatpush1.xpose.msra.mxu0 0.0
        %1768 = vmatprep.subr.mxu0 0.0
        %1769 = vmatpush1.xpose.msra.mxu0 0.0
        %1770 = vmatprep.subr.mxu0 0.0
        %1771 = vmatpush1.xpose.msra.mxu0 0.0
        %1772 = vmatprep.subr.mxu0 0.0
        %1773 = vmatpush1.xpose.msra.mxu0 0.0
        %1774 = vmatprep.subr.mxu0 0.0
        %1775 = vmatpush1.xpose.msra.mxu0 0.0
        %1776 = vmatprep.subr.mxu0 0.0
        %1777 = vmatpush1.xpose.msra.mxu0 0.0
        %1778 = vmatprep.subr.mxu0 0.0
        %1779 = vmatpush1.xpose.msra.mxu0 0.0
        %1780 = vmatprep.subr.mxu0 0.0
        %1781 = vmatpush1.xpose.msra.mxu0 0.0
        %1782 = vmatprep.subr.mxu0 0.0
        %1783 = vmatpush1.xpose.msra.mxu0 0.0
        %1784 = vmatprep.subr.mxu0 0.0
        %1785 = vmatpush1.xpose.msra.mxu0 0.0
        %1786 = vmatprep.subr.mxu0 0.0
        %1787 = vmatpush1.xpose.msra.mxu0 0.0
        %1788 = vmatprep.subr.mxu0 0.0
        %1789 = vmatpush1.xpose.msra.mxu0 0.0
        %1790 = vmatprep.subr.mxu0 0.0
        %1791 = vmatpush1.xpose.msra.mxu0 0.0
        %1792 = vmatprep.subr.mxu0 0.0
        %1793 = vmatpush1.xpose.msra.mxu0 0.0
        %1794 = vmatprep.subr.mxu0 0.0
        %1795 = vmatpush1.xpose.msra.mxu0 0.0
        %1796 = vmatprep.mubr.f32.mxu0 0.0
        %1797 = vmatmul.mubr.f32.gmra.mrb[0].mxu0 %v1724
        %v1798 = vpop.f32.mrb[0].mxu0
        %v1799 = vadd.f32 0.0, %v1798
        %v1800 = vpop.f32.mrb[0].mxu0
        %1801 = vdwg.mxu0
        %v1802 = vmax.f32 %v1608, %v1799
        %s1803 = scalar_lea.vmem [#allocation13], 768
        %v1804 = vld [vmem:[%s1803] sm:$0xff]
        %v1805 = vld [vmem:[%s1803 + $0x8] sm:$0xff]
        %v1806 = vld [vmem:[%s1803 + $0x10] sm:$0xff]
        %v1807 = vld [vmem:[%s1803 + $0x18] sm:$0xff]
        %v1808 = vld [vmem:[%s1803 + $0x20] sm:$0xff]
        %v1809 = vld [vmem:[%s1803 + $0x28] sm:$0xff]
        %v1810 = vld [vmem:[%s1803 + $0x30] sm:$0xff]
        %v1811 = vld [vmem:[%s1803 + $0x38] sm:$0xff]
        %v1812 = vld [vmem:[%s1803 + $0x40] sm:$0xff]
        %v1813 = vld [vmem:[%s1803 + $0x48] sm:$0xff]
        %v1814 = vld [vmem:[%s1803 + $0x50] sm:$0xff]
        %v1815 = vld [vmem:[%s1803 + $0x58] sm:$0xff]
        %v1816 = vld [vmem:[%s1803 + $0x60] sm:$0xff]
        %v1817 = vld [vmem:[%s1803 + $0x68] sm:$0xff]
        %v1818 = vld [vmem:[%s1803 + $0x70] sm:$0xff]
        %v1819 = vld [vmem:[%s1803 + $0x78] sm:$0xff]
        %v1820 = vld [vmem:[%s1803 + $0x80] sm:$0xff]
        %v1821 = vld [vmem:[%s1803 + $0x88] sm:$0xff]
        %v1822 = vld [vmem:[%s1803 + $0x90] sm:$0xff]
        %v1823 = vld [vmem:[%s1803 + $0x98] sm:$0xff]
        %v1824 = vld [vmem:[%s1803 + $0xa0] sm:$0xff]
        %v1825 = vld [vmem:[%s1803 + $0xa8] sm:$0xff]
        %v1826 = vld [vmem:[%s1803 + $0xb0] sm:$0xff]
        %v1827 = vld [vmem:[%s1803 + $0xb8] sm:$0xff]
        %v1828 = vld [vmem:[%s1803 + $0xc0] sm:$0xff]
        %v1829 = vld [vmem:[%s1803 + $0xc8] sm:$0xff]
        %v1830 = vld [vmem:[%s1803 + $0xd0] sm:$0xff]
        %v1831 = vld [vmem:[%s1803 + $0xd8] sm:$0xff]
        %v1832 = vld [vmem:[%s1803 + $0xe0] sm:$0xff]
        %v1833 = vld [vmem:[%s1803 + $0xe8] sm:$0xff]
        %v1834 = vld [vmem:[%s1803 + $0xf0] sm:$0xff]
        %v1835 = vld [vmem:[%s1803 + $0xf8] sm:$0xff]
        %s1836 = scalar_lea.vmem [#allocation15], 3
        %v1837 = vld [vmem:[%s1836] sm:$0x1]
        %v1839 = vlaneseq
        %v1840 = vshrl.u32 %v1839, 7
        %v1841 = vsub.s32 0, %v1840
        %v1842 = vrot.slane %v1837, %v1841
        %1844 = vmatprep.subr.mxu0 0.0
        %1845 = vmatpush1.msra.mxu0 %v1804
        %1846 = vmatprep.subr.mxu0 0.0
        %1847 = vmatpush1.msra.mxu0 %v1805
        %1848 = vmatprep.subr.mxu0 0.0
        %1849 = vmatpush1.msra.mxu0 %v1806
        %1850 = vmatprep.subr.mxu0 0.0
        %1851 = vmatpush1.msra.mxu0 %v1807
        %1852 = vmatprep.subr.mxu0 0.0
        %1853 = vmatpush1.msra.mxu0 %v1808
        %1854 = vmatprep.subr.mxu0 0.0
        %1855 = vmatpush1.msra.mxu0 %v1809
        %1856 = vmatprep.subr.mxu0 0.0
        %1857 = vmatpush1.msra.mxu0 %v1810
        %1858 = vmatprep.subr.mxu0 0.0
        %1859 = vmatpush1.msra.mxu0 %v1811
        %1860 = vmatprep.subr.mxu0 0.0
        %1861 = vmatpush1.msra.mxu0 %v1812
        %1862 = vmatprep.subr.mxu0 0.0
        %1863 = vmatpush1.msra.mxu0 %v1813
        %1864 = vmatprep.subr.mxu0 0.0
        %1865 = vmatpush1.msra.mxu0 %v1814
        %1866 = vmatprep.subr.mxu0 0.0
        %1867 = vmatpush1.msra.mxu0 %v1815
        %1868 = vmatprep.subr.mxu0 0.0
        %1869 = vmatpush1.msra.mxu0 %v1816
        %1870 = vmatprep.subr.mxu0 0.0
        %1871 = vmatpush1.msra.mxu0 %v1817
        %1872 = vmatprep.subr.mxu0 0.0
        %1873 = vmatpush1.msra.mxu0 %v1818
        %1874 = vmatprep.subr.mxu0 0.0
        %1875 = vmatpush1.msra.mxu0 %v1819
        %1876 = vmatprep.subr.mxu0 0.0
        %1877 = vmatpush1.msra.mxu0 %v1820
        %1878 = vmatprep.subr.mxu0 0.0
        %1879 = vmatpush1.msra.mxu0 %v1821
        %1880 = vmatprep.subr.mxu0 0.0
        %1881 = vmatpush1.msra.mxu0 %v1822
        %1882 = vmatprep.subr.mxu0 0.0
        %1883 = vmatpush1.msra.mxu0 %v1823
        %1884 = vmatprep.subr.mxu0 0.0
        %1885 = vmatpush1.msra.mxu0 %v1824
        %1886 = vmatprep.subr.mxu0 0.0
        %1887 = vmatpush1.msra.mxu0 %v1825
        %1888 = vmatprep.subr.mxu0 0.0
        %1889 = vmatpush1.msra.mxu0 %v1826
        %1890 = vmatprep.subr.mxu0 0.0
        %1891 = vmatpush1.msra.mxu0 %v1827
        %1892 = vmatprep.subr.mxu0 0.0
        %1893 = vmatpush1.msra.mxu0 %v1828
        %1894 = vmatprep.subr.mxu0 0.0
        %1895 = vmatpush1.msra.mxu0 %v1829
        %1896 = vmatprep.subr.mxu0 0.0
        %1897 = vmatpush1.msra.mxu0 %v1830
        %1898 = vmatprep.subr.mxu0 0.0
        %1899 = vmatpush1.msra.mxu0 %v1831
        %1900 = vmatprep.subr.mxu0 0.0
        %1901 = vmatpush1.msra.mxu0 %v1832
        %1902 = vmatprep.subr.mxu0 0.0
        %1903 = vmatpush1.msra.mxu0 %v1833
        %1904 = vmatprep.subr.mxu0 0.0
        %1905 = vmatpush1.msra.mxu0 %v1834
        %1906 = vmatprep.subr.mxu0 0.0
        %1907 = vmatpush1.msra.mxu0 %v1835
        %1908 = vmatprep.mubr.f32.mxu0 %v1223
        %1909 = vmatmul.mubr.f32.gmra.mrb[0].mxu0 %v1222
        %v1910 = vpop.f32.mrb[0].mxu0
        %v1911 = vadd.f32 %v1842, %v1910
        %v1912 = vpop.f32.mrb[0].mxu0
        %1913 = vdwg.mxu0
        %s1914 = scalar_lea.vmem [#allocation2], 48
        %v1915 = vld [vmem:[%s1914] sm:$0xff]
        %v1916 = vld [vmem:[%s1914 + $0x8] sm:$0xff]
        %v1918 = vsel %vm1335, %v1911, 0
        %v1921 = vsel %vm1335, %v1915, 0
        %v1924 = vsel %vm1335, %v1916, 0
        %1926 = vmatprep.subr.mxu0 0.0
        %1927 = vmatpush1.xpose.msra.mxu0 %v1921
        %1928 = vmatprep.subr.mxu0 0.0
        %1929 = vmatpush1.xpose.msra.mxu0 %v1924
        %1930 = vmatprep.subr.mxu0 0.0
        %1931 = vmatpush1.xpose.msra.mxu0 0.0
        %1932 = vmatprep.subr.mxu0 0.0
        %1933 = vmatpush1.xpose.msra.mxu0 0.0
        %1934 = vmatprep.subr.mxu0 0.0
        %1935 = vmatpush1.xpose.msra.mxu0 0.0
        %1936 = vmatprep.subr.mxu0 0.0
        %1937 = vmatpush1.xpose.msra.mxu0 0.0
        %1938 = vmatprep.subr.mxu0 0.0
        %1939 = vmatpush1.xpose.msra.mxu0 0.0
        %1940 = vmatprep.subr.mxu0 0.0
        %1941 = vmatpush1.xpose.msra.mxu0 0.0
        %1942 = vmatprep.subr.mxu0 0.0
        %1943 = vmatpush1.xpose.msra.mxu0 0.0
        %1944 = vmatprep.subr.mxu0 0.0
        %1945 = vmatpush1.xpose.msra.mxu0 0.0
        %1946 = vmatprep.subr.mxu0 0.0
        %1947 = vmatpush1.xpose.msra.mxu0 0.0
        %1948 = vmatprep.subr.mxu0 0.0
        %1949 = vmatpush1.xpose.msra.mxu0 0.0
        %1950 = vmatprep.subr.mxu0 0.0
        %1951 = vmatpush1.xpose.msra.mxu0 0.0
        %1952 = vmatprep.subr.mxu0 0.0
        %1953 = vmatpush1.xpose.msra.mxu0 0.0
        %1954 = vmatprep.subr.mxu0 0.0
        %1955 = vmatpush1.xpose.msra.mxu0 0.0
        %1956 = vmatprep.subr.mxu0 0.0
        %1957 = vmatpush1.xpose.msra.mxu0 0.0
        %1958 = vmatprep.subr.mxu0 0.0
        %1959 = vmatpush1.xpose.msra.mxu0 0.0
        %1960 = vmatprep.subr.mxu0 0.0
        %1961 = vmatpush1.xpose.msra.mxu0 0.0
        %1962 = vmatprep.subr.mxu0 0.0
        %1963 = vmatpush1.xpose.msra.mxu0 0.0
        %1964 = vmatprep.subr.mxu0 0.0
        %1965 = vmatpush1.xpose.msra.mxu0 0.0
        %1966 = vmatprep.subr.mxu0 0.0
        %1967 = vmatpush1.xpose.msra.mxu0 0.0
        %1968 = vmatprep.subr.mxu0 0.0
        %1969 = vmatpush1.xpose.msra.mxu0 0.0
        %1970 = vmatprep.subr.mxu0 0.0
        %1971 = vmatpush1.xpose.msra.mxu0 0.0
        %1972 = vmatprep.subr.mxu0 0.0
        %1973 = vmatpush1.xpose.msra.mxu0 0.0
        %1974 = vmatprep.subr.mxu0 0.0
        %1975 = vmatpush1.xpose.msra.mxu0 0.0
        %1976 = vmatprep.subr.mxu0 0.0
        %1977 = vmatpush1.xpose.msra.mxu0 0.0
        %1978 = vmatprep.subr.mxu0 0.0
        %1979 = vmatpush1.xpose.msra.mxu0 0.0
        %1980 = vmatprep.subr.mxu0 0.0
        %1981 = vmatpush1.xpose.msra.mxu0 0.0
        %1982 = vmatprep.subr.mxu0 0.0
        %1983 = vmatpush1.xpose.msra.mxu0 0.0
        %1984 = vmatprep.subr.mxu0 0.0
        %1985 = vmatpush1.xpose.msra.mxu0 0.0
        %1986 = vmatprep.subr.mxu0 0.0
        %1987 = vmatpush1.xpose.msra.mxu0 0.0
        %1988 = vmatprep.subr.mxu0 0.0
        %1989 = vmatpush1.xpose.msra.mxu0 0.0
        %1990 = vmatprep.mubr.f32.mxu0 0.0
        %1991 = vmatmul.mubr.f32.gmra.mrb[0].mxu0 %v1918
        %v1992 = vpop.f32.mrb[0].mxu0
        %v1993 = vadd.f32 0.0, %v1992
        %v1994 = vpop.f32.mrb[0].mxu0
        %1995 = vdwg.mxu0
        %v1996 = vmax.f32 %v1802, %v1993
        %s1997 = smul.u32 %s47, 8
        %v1998 = vlaneseq
        %v1999 = vshrl.u32 %v1998, 7
        %v2000 = vstv %s1997
        %v2001 = vadd.s32 %v2000, %v1999
        %v2002 = vlaneseq
        %v2003 = vand.u32 %v2002, 127
        %v2004 = vsub.s32 %v2001, %v2003
        %vm2005 = vcmp.lt.s32.totalorder %v2004, 0
        %v2006 = vsub.s32 0, %v2004
        %v2007 = vsel %vm2005, %v2006, %v2004
        %vm2008 = vcmp.le.s32.totalorder %v2007, 3
        %v2009 = vld [vmem:[%s570] sm:$0x1]
        %vm2010 = vcmp.gt.f32.partialorder %v2009, 0.0
        %v2011 = vsel %vm2010, 1, 0
        %v2012 = vlaneseq
        %v2013 = vshrl.u32 %v2012, 7
        %v2014 = vsub.s32 0, %v2013
        %v2015 = vrot.slane %v2011, %v2014
        %vm2016 = vcmp.eq.s32.totalorder %v2015, 1
        %vm2017 = vmand %vm2008, %vm2016
        %v2018 = vsub.f32 %v1996, 10000.0
        %v2019 = vsel %vm2017, %v1996, %v2018
        %vm2020 = vcmask 130048
        %v2021 = vsel %vm2020, %v2019, -inf
        %2022 = vmax.xlane.f32.xlu0 %v2021
        %v2023 = vpop.xlane.xlu0 %2022
        %v2024 = vsub.f32 %v2019, %v2023
        %v2025 = vmul.f32 %v2024, 1.442695
        %v2026 = vpow.pop %v2025
        %v2027 = vsel %vm2020, %v2026, 0.0
        %2028 = vadd.xlane.f32.xlu0 %v2027
        %v2029 = vpop.xlane.xlu0 %2028
        %v2030 = vrcp.pop %v2029
        %v2031 = vmul.f32 %v2029, %v2030
        %v2032 = vsub.f32 2.0, %v2031
        %v2033 = vmul.f32 %v2030, %v2032
        %v2034 = vmul.f32 %v2026, %v2033
        %v2035 = vld [vmem:[#allocation3] sm:$0xff]
        %v2036 = vld [vmem:[#allocation3 + $0x8] sm:$0xff]
        %v2038 = vsel %vm2020, %v2034, 0
        %2040 = vmatprep.subr.mxu0 0.0
        %2041 = vmatpush1.msra.mxu0 %v2035
        %2042 = vmatprep.subr.mxu0 0.0
        %2043 = vmatpush1.msra.mxu0 %v2036
        %2044 = vmatprep.subr.mxu0 0.0
        %2045 = vmatpush1.msra.mxu0 0.0
        %2046 = vmatprep.subr.mxu0 0.0
        %2047 = vmatpush1.msra.mxu0 0.0
        %2048 = vmatprep.subr.mxu0 0.0
        %2049 = vmatpush1.msra.mxu0 0.0
        %2050 = vmatprep.subr.mxu0 0.0
        %2051 = vmatpush1.msra.mxu0 0.0
        %2052 = vmatprep.subr.mxu0 0.0
        %2053 = vmatpush1.msra.mxu0 0.0
        %2054 = vmatprep.subr.mxu0 0.0
        %2055 = vmatpush1.msra.mxu0 0.0
        %2056 = vmatprep.subr.mxu0 0.0
        %2057 = vmatpush1.msra.mxu0 0.0
        %2058 = vmatprep.subr.mxu0 0.0
        %2059 = vmatpush1.msra.mxu0 0.0
        %2060 = vmatprep.subr.mxu0 0.0
        %2061 = vmatpush1.msra.mxu0 0.0
        %2062 = vmatprep.subr.mxu0 0.0
        %2063 = vmatpush1.msra.mxu0 0.0
        %2064 = vmatprep.subr.mxu0 0.0
        %2065 = vmatpush1.msra.mxu0 0.0
        %2066 = vmatprep.subr.mxu0 0.0
        %2067 = vmatpush1.msra.mxu0 0.0
        %2068 = vmatprep.subr.mxu0 0.0
        %2069 = vmatpush1.msra.mxu0 0.0
        %2070 = vmatprep.subr.mxu0 0.0
        %2071 = vmatpush1.msra.mxu0 0.0
        %2072 = vmatprep.subr.mxu0 0.0
        %2073 = vmatpush1.msra.mxu0 0.0
        %2074 = vmatprep.subr.mxu0 0.0
        %2075 = vmatpush1.msra.mxu0 0.0
        %2076 = vmatprep.subr.mxu0 0.0
        %2077 = vmatpush1.msra.mxu0 0.0
        %2078 = vmatprep.subr.mxu0 0.0
        %2079 = vmatpush1.msra.mxu0 0.0
        %2080 = vmatprep.subr.mxu0 0.0
        %2081 = vmatpush1.msra.mxu0 0.0
        %2082 = vmatprep.subr.mxu0 0.0
        %2083 = vmatpush1.msra.mxu0 0.0
        %2084 = vmatprep.subr.mxu0 0.0
        %2085 = vmatpush1.msra.mxu0 0.0
        %2086 = vmatprep.subr.mxu0 0.0
        %2087 = vmatpush1.msra.mxu0 0.0
        %2088 = vmatprep.subr.mxu0 0.0
        %2089 = vmatpush1.msra.mxu0 0.0
        %2090 = vmatprep.subr.mxu0 0.0
        %2091 = vmatpush1.msra.mxu0 0.0
        %2092 = vmatprep.subr.mxu0 0.0
        %2093 = vmatpush1.msra.mxu0 0.0
        %2094 = vmatprep.subr.mxu0 0.0
        %2095 = vmatpush1.msra.mxu0 0.0
        %2096 = vmatprep.subr.mxu0 0.0
        %2097 = vmatpush1.msra.mxu0 0.0
        %2098 = vmatprep.subr.mxu0 0.0
        %2099 = vmatpush1.msra.mxu0 0.0
        %2100 = vmatprep.subr.mxu0 0.0
        %2101 = vmatpush1.msra.mxu0 0.0
        %2102 = vmatprep.subr.mxu0 0.0
        %2103 = vmatpush1.msra.mxu0 0.0
        %2104 = vmatprep.mubr.f32.mxu0 0.0
        %2105 = vmatmul.mubr.f32.gmra.mrb[0].mxu0 %v2038
        %v2106 = vpop.f32.mrb[0].mxu0
        %v2107 = vadd.f32 0.0, %v2106
        %v2108 = vpop.f32.mrb[0].mxu0
        %2109 = vdwg.mxu0
        %v2110 = vld [vmem:[%s597] sm:$0xff]
        %2111 = vst [vmem:[%s687] sm:$0xff] %v2110
        %2112 = vst [vmem:[%s687 + $0x8] sm:$0xff] %v2107
        %2113 = vst.msk [vmem:[%s694] sm:$0xff] %vm2020, %v2034
        %s2114 = sand.u32 %s324, 1
        %s2115 = scalar_lea.sflag [#allocation6], %s2114
        %s2116 = sand.u32 %s324, 1
        %s2117 = smul.addr %s2116, 16
        %s2118 = scalar_lea.vmem [#allocation22], %s2117
        %s2119 = sand.u32 %s352, 1
        %s2120 = scalar_lea.sflag [#allocation24], %s2119
        %s2121 = sand.u32 %s352, 1
        %s2122 = smul.addr %s2121, 8
        %s2123 = scalar_lea.vmem [#allocation23], %s2122
        // Predicated region
        $region113: #{tpu_custom_call.1} parent=63 // pred_check
          %p2124 = pneg %p334
        $region114: #{tpu_custom_call.1} parent=63 // pred_check_branch
          %2126 = sbr.rel (%p2124) target = $region116
        $region115: #{tpu_custom_call.1} parent=63 // pred_region
          %s2128 = ssub.s32 256, 256
          %2129 = vsyncadd %s2115, %s2128
          %s2130 = smul.addr %s47, 2
          %s2131 = smul.addr %s46, 4
          %s2132 = sadd.s32 %s2130, %s2131
          %s2133 = smul.addr %s2132, 128
          %s2134 = scalar_lea.hbm %s11, %s2133
          %s2136 = sshll.u32 %s2118, 4
          %s2137 = int_to_ptr.vmem [resolvable:$true] %s2136
          %2139 = dma.vmem_to_hbm [thread:$0]  %s2137, 256, %s2134, %s2115
        $region116: #{tpu_custom_call.1} parent=63 // pred_fallthru
          _
        // Predicated region
        $region117: #{tpu_custom_call.1} parent=63 // pred_check
          %p2140 = pneg %p362
        $region118: #{tpu_custom_call.1} parent=63 // pred_check_branch
          %2142 = sbr.rel (%p2140) target = $region120
        $region119: #{tpu_custom_call.1} parent=63 // pred_region
          %s2144 = ssub.s32 128, 128
          %2145 = vsyncadd %s2120, %s2144
          %s2146 = smul.addr %s46, 2
          %s2147 = sadd.s32 %s47, %s2146
          %s2148 = smul.addr %s2147, 128
          %s2149 = scalar_lea.hbm %s12, %s2148
          %s2151 = sshll.u32 %s2123, 4
          %s2152 = int_to_ptr.vmem [resolvable:$true] %s2151
          %2154 = dma.vmem_to_hbm [thread:$0]  %s2152, 128, %s2149, %s2120
        $region120: #{tpu_custom_call.1} parent=63 // pred_fallthru
          _
      $region64: #{tpu_custom_call.1} parent=5 // pred_fallthru
        _
      %p2155 = scmp.le.s32.totalorder 2, %s37
      // Predicated region
      $region121: #{tpu_custom_call.1} parent=5 // pred_check
        %p2156 = pneg %p2155
      $region122: #{tpu_custom_call.1} parent=5 // pred_check_branch
        %2158 = sbr.rel (%p2156) target = $region124
      $region123: #{tpu_custom_call.1} parent=5 // pred_region
        %s2159 = ssub.s32 %s37, 2
        // Predicated region
        $region125: #{tpu_custom_call.1} parent=123 // pred_check
          %p2160 = pneg %p340
        $region126: #{tpu_custom_call.1} parent=123 // pred_check_branch
          %2162 = sbr.rel (%p2160) target = $region128
        $region127: #{tpu_custom_call.1} parent=123 // pred_region
          %s2163 = sand.u32 %s325, 1
          %s2164 = scalar_lea.sflag [#allocation6], %s2163
          %s2165 = sand.u32 %s325, 1
          %s2166 = smul.addr %s2165, 16
          %s2167 = scalar_lea.vmem [#allocation22], %s2166
          %2168 = dma.done %s2164, 256
        $region128: #{tpu_custom_call.1} parent=123 // pred_fallthru
          _
        // Predicated region
        $region129: #{tpu_custom_call.1} parent=123 // pred_check
          %p2169 = pneg %p368
        $region130: #{tpu_custom_call.1} parent=123 // pred_check_branch
          %2171 = sbr.rel (%p2169) target = $region132
        $region131: #{tpu_custom_call.1} parent=123 // pred_region
          %s2172 = sand.u32 %s353, 1
          %s2173 = scalar_lea.sflag [#allocation24], %s2172
          %s2174 = sand.u32 %s353, 1
          %s2175 = smul.addr %s2174, 8
          %s2176 = scalar_lea.vmem [#allocation23], %s2175
          %2177 = dma.done %s2173, 128
        $region132: #{tpu_custom_call.1} parent=123 // pred_fallthru
          _
      $region124: #{tpu_custom_call.1} parent=5 // pred_fallthru
        _
    $region6: #{tpu_custom_call.1} parent=1 // loop_footer
      %s41 = sadd.s32 1, %s37
    $region7: #{tpu_custom_call.1} parent=1 // loop_footer_branch
      %36 = sbr.rel target = $region3
    $region8: #{tpu_custom_call.1} parent=1 // loop_exit
      _
    %2178 = vsyncpa [#allocation5], 1
    %s2179 = scalar_lea.sflag [#allocation5], 1
    %2180 = vsyncpa %s2179, 1
    %2181 = vsyncpa [#allocation8], 1
    %s2182 = scalar_lea.sflag [#allocation8], 1
    %2183 = vsyncpa %s2182, 1
    %2184 = vsyncpa [#allocation11], 1
    %s2185 = scalar_lea.sflag [#allocation11], 1
    %2186 = vsyncpa %s2185, 1
    %2187 = vsyncpa [#allocation14], 1
    %2188 = vsyncpa [#allocation17], 1
    %2189 = vsyncpa [#allocation20], 1
    %2190 = vsyncpa [#allocation6], 1
    %s2191 = scalar_lea.sflag [#allocation6], 1
    %2192 = vsyncpa %s2191, 1
    %2193 = vsyncpa [#allocation24], 1
    %s2194 = scalar_lea.sflag [#allocation24], 1
    %2195 = vsyncpa %s2194, 1

</llo_original>
